<compile_context>
chip_gen: v7x
topology: tpu7x:2x2x1
jax: 0.10.0
libtpu: 0.0.40
codegen_flags: <defaults>
</compile_context>

<pallas_src>
import jax
import jax.numpy as jnp
from jax import lax
from jax.experimental import pallas as pl
from jax.experimental.pallas import tpu as pltpu

# ---- model config (matches the PyTorch script) ----
HIDDEN_SIZE = 64
INPUT_SIZE = 2
NUM_LAYERS = 1
OUTPUT_SIZE = 1

B_PAD_MULT = 8  # sublane multiple


def _sigmoid(x):
    # sigmoid(x) == 0.5*(tanh(x/2)+1): 1 EUP push instead of exp + reciprocal (2 pushes).
    return 0.5 * jnp.tanh(0.5 * x) + 0.5


def _lstm_kernel(x_ref, h0_ref, c0_ref, w_ih_ref, b_ref, w_hh_ref,
                 w_out_ref, b_out_ref, y_ref):
    """Serial LSTM recurrence, everything resident in VMEM / vregs.

    x_ref    : (T, Bp, I)   raw inputs (I = 2)
    h0/c0    : (Bp, H)
    w_ih_ref : (I, 4H)      pre-transposed input weights
    b_ref    : (1, 4H)      bias_ih + bias_hh
    w_hh_ref : (H, 4H)      pre-transposed recurrent weights (unpadded gate columns)
    w_out_ref: (1, H), b_out_ref: (1, 1)
    y_ref    : (Bp, T)      lane-compact output (O=1 squeezed by the wrapper)
    """
    T = x_ref.shape[0]
    H = h0_ref.shape[1]

    # Loop-invariant operands: load once, stay live in vregs across the unroll.
    w_hh = w_hh_ref[...]          # (H, 4H)
    w_ih0 = w_ih_ref[0:1, :]      # (1, 4H)
    w_ih1 = w_ih_ref[1:2, :]      # (1, 4H)
    b = b_ref[...]                # (1, 4H)
    w_out = w_out_ref[...]        # (1, H)

    # Carry h / c as SSA values (half a vreg each) — never bounce through VMEM.
    h = h0_ref[...]               # (Bp, H)
    c = c0_ref[...]               # (Bp, H)

    ys = []
    # T is static & small: fully unrolled so VPU/EUP work of step t overlaps the
    # MXU push of step t+1.
    for t in range(T):
        x_t = x_ref[t]            # (Bp, I)
        # Fused input projection (I=2): two broadcast-FMAs + bias on the VPU.
        gx = x_t[:, 0:1] * w_ih0 + x_t[:, 1:2] * w_ih1 + b            # (Bp, 4H)
        gates = gx + jnp.dot(h, w_hh, preferred_element_type=jnp.float32)

        # PyTorch gate order [i, f, g, o]; 64-wide slices of the 256-col gate block.
        i_g = _sigmoid(gates[:, 0 * H:1 * H])
        f_g = _sigmoid(gates[:, 1 * H:2 * H])
        g_g = jnp.tanh(gates[:, 2 * H:3 * H])
        o_g = _sigmoid(gates[:, 3 * H:4 * H])

        c = f_g * c + i_g * g_g
        h = o_g * jnp.tanh(c)

        # Output head (O=1): VPU mul + cross-lane reduce, off the MXU.
        ys.append(jnp.sum(h * w_out, axis=-1, keepdims=True))         # (Bp, 1)

    y = jnp.concatenate(ys, axis=1) + b_out_ref[...]                  # (Bp, T)
    y_ref[...] = y.astype(y_ref.dtype)


@jax.jit
def lstm_forward(x, h0, c0, params):
    """x: (B, T, I) float32, h0/c0: (num_layers=1, B, H). Returns (B, T, O)."""
    B, T, _ = x.shape
    H = HIDDEN_SIZE
    Bp = ((B + B_PAD_MULT - 1) // B_PAD_MULT) * B_PAD_MULT

    x32 = x.astype(jnp.float32)
    x_tbi = jnp.transpose(x32, (1, 0, 2))                     # (T, B, I)
    x_tbi = jnp.pad(x_tbi, ((0, 0), (0, Bp - B), (0, 0)))     # (T, Bp, I)

    # Pre-transposed, UNPADDED parameter layouts (4H = 256 gate columns).
    w_ih = params["weight_ih_l0"].T.astype(jnp.float32)                         # (I, 4H)
    w_hh = params["weight_hh_l0"].T.astype(jnp.float32)                         # (H, 4H)
    b = (params["bias_ih_l0"] + params["bias_hh_l0"]).reshape(1, 4 * H).astype(jnp.float32)
    w_out = params["out_weight"].reshape(1, H).astype(jnp.float32)              # (1, H)
    b_out = params["out_bias"].reshape(1, 1).astype(jnp.float32)                # (1, 1)

    h0_p = jnp.pad(h0[0].astype(jnp.float32), ((0, Bp - B), (0, 0)))            # (Bp, H)
    c0_p = jnp.pad(c0[0].astype(jnp.float32), ((0, Bp - B), (0, 0)))            # (Bp, H)

    vmem = pl.BlockSpec(memory_space=pltpu.MemorySpace.VMEM)

    y_bt = pl.pallas_call(
        _lstm_kernel,
        out_shape=jax.ShapeDtypeStruct((Bp, T), jnp.float32),
        in_specs=[vmem] * 8,
        out_specs=vmem,
    )(x_tbi, h0_p, c0_p, w_ih, b, w_hh, w_out, b_out)

    return y_bt[:B, :, None]                                  # (B, T, O=1)


def init_params(key):
    """Deterministic init mimicking PyTorch's U(-1/sqrt(H), 1/sqrt(H))."""
    H, I, O = HIDDEN_SIZE, INPUT_SIZE, OUTPUT_SIZE
    k = 1.0 / jnp.sqrt(jnp.float32(H))
    keys = jax.random.split(key, 6)
    u = lambda kk, shape, bound: jax.random.uniform(
        kk, shape, jnp.float32, minval=-bound, maxval=bound)
    return {
        "weight_ih_l0": u(keys[0], (4 * H, I), k),
        "weight_hh_l0": u(keys[1], (4 * H, H), k),
        "bias_ih_l0":   u(keys[2], (4 * H,), k),
        "bias_hh_l0":   u(keys[3], (4 * H,), k),
        "out_weight":   u(keys[4], (O, H), k),
        "out_bias":     u(keys[5], (O,), k),
    }


def _reference_forward(x, h0, c0, params):
    """Pure-JAX reference of the same math (f32, HIGHEST matmul precision)."""
    H = HIDDEN_SIZE
    hp = lax.Precision.HIGHEST
    w_ih = params["weight_ih_l0"].T
    w_hh = params["weight_hh_l0"].T
    b = params["bias_ih_l0"] + params["bias_hh_l0"]
    w_out = params["out_weight"].T
    b_out = params["out_bias"]

    def step(carry, x_t):
        h, c = carry
        gates = (jnp.dot(x_t, w_ih, precision=hp)
                 + jnp.dot(h, w_hh, precision=hp) + b)
        i_g = jax.nn.sigmoid(gates[:, 0 * H:1 * H])
        f_g = jax.nn.sigmoid(gates[:, 1 * H:2 * H])
        g_g = jnp.tanh(gates[:, 2 * H:3 * H])
        o_g = jax.nn.sigmoid(gates[:, 3 * H:4 * H])
        c_new = f_g * c + i_g * g_g
        h_new = o_g * jnp.tanh(c_new)
        return (h_new, c_new), jnp.dot(h_new, w_out, precision=hp) + b_out

    x_tbi = jnp.transpose(x, (1, 0, 2))
    (_, _), y_tbo = lax.scan(step, (h0[0], c0[0]), x_tbi)
    return jnp.transpose(y_tbo, (1, 0, 2))


if __name__ == "__main__":
    B, T = 2, 8
    key = jax.random.PRNGKey(0)
    k_x, k_h, k_c, k_p = jax.random.split(key, 4)

    x = jax.random.normal(k_x, (B, T, INPUT_SIZE), jnp.float32)
    h0 = jax.random.normal(k_h, (NUM_LAYERS, B, HIDDEN_SIZE), jnp.float32)
    c0 = jax.random.normal(k_c, (NUM_LAYERS, B, HIDDEN_SIZE), jnp.float32)
    params = init_params(k_p)

    y = jax.block_until_ready(lstm_forward(x, h0, c0, params))
    y_ref = jax.block_until_ready(_reference_forward(x, h0, c0, params))

    assert y.shape == (B, T, OUTPUT_SIZE), y.shape
    assert jnp.allclose(y, y_ref, atol=1e-4, rtol=1e-4), (
        "mismatch vs reference, max abs err = %e"
        % float(jnp.max(jnp.abs(y - y_ref))))

    print("KERNEL_OK")
</pallas_src>

<mosaic_0001>
module attributes {stable_mosaic.version = 11 : i64} {
  func.func @_lstm_kernel(%arg0: memref<8x8x2xf32, #tpu.memory_space<vmem>>, %arg1: memref<8x64xf32, #tpu.memory_space<vmem>>, %arg2: memref<8x64xf32, #tpu.memory_space<vmem>>, %arg3: memref<2x256xf32, #tpu.memory_space<vmem>>, %arg4: memref<1x256xf32, #tpu.memory_space<vmem>>, %arg5: memref<64x256xf32, #tpu.memory_space<vmem>>, %arg6: memref<1x64xf32, #tpu.memory_space<vmem>>, %arg7: memref<1x1xf32, #tpu.memory_space<vmem>>, %arg8: memref<8x8xf32, #tpu.memory_space<vmem>>) attributes {dimension_semantics = [], scalar_prefetch = 0 : i64, scratch_operands = 0 : i64, tpu.core_type = #tpu.core_type<tc>} {
    %c0 = arith.constant 0 : index
    %c0_0 = arith.constant 0 : index
    %0 = vector.load %arg5[%c0, %c0_0] : memref<64x256xf32, #tpu.memory_space<vmem>>, vector<64x256xf32>
    %c0_1 = arith.constant 0 : index
    %c0_2 = arith.constant 0 : index
    %1 = vector.load %arg3[%c0_1, %c0_2] : memref<2x256xf32, #tpu.memory_space<vmem>>, vector<1x256xf32>
    %c1 = arith.constant 1 : index
    %c0_3 = arith.constant 0 : index
    %2 = vector.load %arg3[%c1, %c0_3] : memref<2x256xf32, #tpu.memory_space<vmem>>, vector<1x256xf32>
    %c0_4 = arith.constant 0 : index
    %c0_5 = arith.constant 0 : index
    %3 = vector.load %arg4[%c0_4, %c0_5] : memref<1x256xf32, #tpu.memory_space<vmem>>, vector<1x256xf32>
    %c0_6 = arith.constant 0 : index
    %c0_7 = arith.constant 0 : index
    %4 = vector.load %arg6[%c0_6, %c0_7] : memref<1x64xf32, #tpu.memory_space<vmem>>, vector<1x64xf32>
    %c0_8 = arith.constant 0 : index
    %c0_9 = arith.constant 0 : index
    %5 = vector.load %arg1[%c0_8, %c0_9] : memref<8x64xf32, #tpu.memory_space<vmem>>, vector<8x64xf32>
    %c0_10 = arith.constant 0 : index
    %c0_11 = arith.constant 0 : index
    %6 = vector.load %arg2[%c0_10, %c0_11] : memref<8x64xf32, #tpu.memory_space<vmem>>, vector<8x64xf32>
    %c0_12 = arith.constant 0 : index
    %c0_13 = arith.constant 0 : index
    %c0_14 = arith.constant 0 : index
    %7 = vector.load %arg0[%c0_12, %c0_13, %c0_14] : memref<8x8x2xf32, #tpu.memory_space<vmem>>, vector<1x8x2xf32>
    %8 = vector.shape_cast %7 : vector<1x8x2xf32> to vector<8x2xf32>
    %9 = vector.extract_strided_slice %8 {offsets = [0, 0], sizes = [8, 1], strides = [1, 1]} : vector<8x2xf32> to vector<8x1xf32>
    %10 = vector.broadcast %9 : vector<8x1xf32> to vector<8x256xf32>
    %11 = vector.broadcast %1 : vector<1x256xf32> to vector<8x256xf32>
    %12 = arith.mulf %10, %11 : vector<8x256xf32>
    %13 = vector.extract_strided_slice %8 {offsets = [0, 1], sizes = [8, 1], strides = [1, 1]} : vector<8x2xf32> to vector<8x1xf32>
    %14 = vector.broadcast %13 : vector<8x1xf32> to vector<8x256xf32>
    %15 = vector.broadcast %2 : vector<1x256xf32> to vector<8x256xf32>
    %16 = arith.mulf %14, %15 : vector<8x256xf32>
    %17 = arith.addf %12, %16 : vector<8x256xf32>
    %18 = vector.broadcast %3 : vector<1x256xf32> to vector<8x256xf32>
    %19 = arith.addf %17, %18 : vector<8x256xf32>
    %cst = arith.constant dense<0.000000e+00> : vector<8x256xf32>
    %20 = tpu.matmul %5, %0, %cst {dimension_numbers = #tpu.dot_dimension_numbers<[1], [0], [0], [1], [0, 0, 1, 1], [], []>} : vector<8x64xf32>, vector<64x256xf32>, vector<8x256xf32> -> vector<8x256xf32>
    %21 = arith.addf %19, %20 : vector<8x256xf32>
    %22 = vector.extract_strided_slice %21 {offsets = [0, 0], sizes = [8, 64], strides = [1, 1]} : vector<8x256xf32> to vector<8x64xf32>
    %cst_15 = arith.constant 5.000000e-01 : f32
    %23 = vector.broadcast %cst_15 : f32 to vector<8x64xf32>
    %24 = arith.mulf %23, %22 : vector<8x64xf32>
    %25 = math.tanh %24 : vector<8x64xf32>
    %cst_16 = arith.constant 5.000000e-01 : f32
    %26 = vector.broadcast %cst_16 : f32 to vector<8x64xf32>
    %27 = arith.mulf %26, %25 : vector<8x64xf32>
    %cst_17 = arith.constant 5.000000e-01 : f32
    %28 = vector.broadcast %cst_17 : f32 to vector<8x64xf32>
    %29 = arith.addf %27, %28 : vector<8x64xf32>
    %30 = vector.extract_strided_slice %21 {offsets = [0, 64], sizes = [8, 64], strides = [1, 1]} : vector<8x256xf32> to vector<8x64xf32>
    %cst_18 = arith.constant 5.000000e-01 : f32
    %31 = vector.broadcast %cst_18 : f32 to vector<8x64xf32>
    %32 = arith.mulf %31, %30 : vector<8x64xf32>
    %33 = math.tanh %32 : vector<8x64xf32>
    %cst_19 = arith.constant 5.000000e-01 : f32
    %34 = vector.broadcast %cst_19 : f32 to vector<8x64xf32>
    %35 = arith.mulf %34, %33 : vector<8x64xf32>
    %cst_20 = arith.constant 5.000000e-01 : f32
    %36 = vector.broadcast %cst_20 : f32 to vector<8x64xf32>
    %37 = arith.addf %35, %36 : vector<8x64xf32>
    %38 = vector.extract_strided_slice %21 {offsets = [0, 128], sizes = [8, 64], strides = [1, 1]} : vector<8x256xf32> to vector<8x64xf32>
    %39 = math.tanh %38 : vector<8x64xf32>
    %40 = vector.extract_strided_slice %21 {offsets = [0, 192], sizes = [8, 64], strides = [1, 1]} : vector<8x256xf32> to vector<8x64xf32>
    %cst_21 = arith.constant 5.000000e-01 : f32
    %41 = vector.broadcast %cst_21 : f32 to vector<8x64xf32>
    %42 = arith.mulf %41, %40 : vector<8x64xf32>
    %43 = math.tanh %42 : vector<8x64xf32>
    %cst_22 = arith.constant 5.000000e-01 : f32
    %44 = vector.broadcast %cst_22 : f32 to vector<8x64xf32>
    %45 = arith.mulf %44, %43 : vector<8x64xf32>
    %cst_23 = arith.constant 5.000000e-01 : f32
    %46 = vector.broadcast %cst_23 : f32 to vector<8x64xf32>
    %47 = arith.addf %45, %46 : vector<8x64xf32>
    %48 = arith.mulf %37, %6 : vector<8x64xf32>
    %49 = arith.mulf %29, %39 : vector<8x64xf32>
    %50 = arith.addf %48, %49 : vector<8x64xf32>
    %51 = math.tanh %50 : vector<8x64xf32>
    %52 = arith.mulf %47, %51 : vector<8x64xf32>
    %53 = vector.broadcast %4 : vector<1x64xf32> to vector<8x64xf32>
    %54 = arith.mulf %52, %53 : vector<8x64xf32>
    %cst_24 = arith.constant dense<0.000000e+00> : vector<8xf32>
    %55 = vector.multi_reduction <add>, %54, %cst_24 [1] : vector<8x64xf32> to vector<8xf32>
    %56 = vector.shape_cast %55 : vector<8xf32> to vector<8x1xf32>
    %c1_25 = arith.constant 1 : index
    %c0_26 = arith.constant 0 : index
    %c0_27 = arith.constant 0 : index
    %57 = vector.load %arg0[%c1_25, %c0_26, %c0_27] : memref<8x8x2xf32, #tpu.memory_space<vmem>>, vector<1x8x2xf32>
    %58 = vector.shape_cast %57 : vector<1x8x2xf32> to vector<8x2xf32>
    %59 = vector.extract_strided_slice %58 {offsets = [0, 0], sizes = [8, 1], strides = [1, 1]} : vector<8x2xf32> to vector<8x1xf32>
    %60 = vector.broadcast %59 : vector<8x1xf32> to vector<8x256xf32>
    %61 = vector.broadcast %1 : vector<1x256xf32> to vector<8x256xf32>
    %62 = arith.mulf %60, %61 : vector<8x256xf32>
    %63 = vector.extract_strided_slice %58 {offsets = [0, 1], sizes = [8, 1], strides = [1, 1]} : vector<8x2xf32> to vector<8x1xf32>
    %64 = vector.broadcast %63 : vector<8x1xf32> to vector<8x256xf32>
    %65 = vector.broadcast %2 : vector<1x256xf32> to vector<8x256xf32>
    %66 = arith.mulf %64, %65 : vector<8x256xf32>
    %67 = arith.addf %62, %66 : vector<8x256xf32>
    %68 = vector.broadcast %3 : vector<1x256xf32> to vector<8x256xf32>
    %69 = arith.addf %67, %68 : vector<8x256xf32>
    %cst_28 = arith.constant dense<0.000000e+00> : vector<8x256xf32>
    %70 = tpu.matmul %52, %0, %cst_28 {dimension_numbers = #tpu.dot_dimension_numbers<[1], [0], [0], [1], [0, 0, 1, 1], [], []>} : vector<8x64xf32>, vector<64x256xf32>, vector<8x256xf32> -> vector<8x256xf32>
    %71 = arith.addf %69, %70 : vector<8x256xf32>
    %72 = vector.extract_strided_slice %71 {offsets = [0, 0], sizes = [8, 64], strides = [1, 1]} : vector<8x256xf32> to vector<8x64xf32>
    %cst_29 = arith.constant 5.000000e-01 : f32
    %73 = vector.broadcast %cst_29 : f32 to vector<8x64xf32>
    %74 = arith.mulf %73, %72 : vector<8x64xf32>
    %75 = math.tanh %74 : vector<8x64xf32>
    %cst_30 = arith.constant 5.000000e-01 : f32
    %76 = vector.broadcast %cst_30 : f32 to vector<8x64xf32>
    %77 = arith.mulf %76, %75 : vector<8x64xf32>
    %cst_31 = arith.constant 5.000000e-01 : f32
    %78 = vector.broadcast %cst_31 : f32 to vector<8x64xf32>
    %79 = arith.addf %77, %78 : vector<8x64xf32>
    %80 = vector.extract_strided_slice %71 {offsets = [0, 64], sizes = [8, 64], strides = [1, 1]} : vector<8x256xf32> to vector<8x64xf32>
    %cst_32 = arith.constant 5.000000e-01 : f32
    %81 = vector.broadcast %cst_32 : f32 to vector<8x64xf32>
    %82 = arith.mulf %81, %80 : vector<8x64xf32>
    %83 = math.tanh %82 : vector<8x64xf32>
    %cst_33 = arith.constant 5.000000e-01 : f32
    %84 = vector.broadcast %cst_33 : f32 to vector<8x64xf32>
    %85 = arith.mulf %84, %83 : vector<8x64xf32>
    %cst_34 = arith.constant 5.000000e-01 : f32
    %86 = vector.broadcast %cst_34 : f32 to vector<8x64xf32>
    %87 = arith.addf %85, %86 : vector<8x64xf32>
    %88 = vector.extract_strided_slice %71 {offsets = [0, 128], sizes = [8, 64], strides = [1, 1]} : vector<8x256xf32> to vector<8x64xf32>
    %89 = math.tanh %88 : vector<8x64xf32>
    %90 = vector.extract_strided_slice %71 {offsets = [0, 192], sizes = [8, 64], strides = [1, 1]} : vector<8x256xf32> to vector<8x64xf32>
    %cst_35 = arith.constant 5.000000e-01 : f32
    %91 = vector.broadcast %cst_35 : f32 to vector<8x64xf32>
    %92 = arith.mulf %91, %90 : vector<8x64xf32>
    %93 = math.tanh %92 : vector<8x64xf32>
    %cst_36 = arith.constant 5.000000e-01 : f32
    %94 = vector.broadcast %cst_36 : f32 to vector<8x64xf32>
    %95 = arith.mulf %94, %93 : vector<8x64xf32>
    %cst_37 = arith.constant 5.000000e-01 : f32
    %96 = vector.broadcast %cst_37 : f32 to vector<8x64xf32>
    %97 = arith.addf %95, %96 : vector<8x64xf32>
    %98 = arith.mulf %87, %50 : vector<8x64xf32>
    %99 = arith.mulf %79, %89 : vector<8x64xf32>
    %100 = arith.addf %98, %99 : vector<8x64xf32>
    %101 = math.tanh %100 : vector<8x64xf32>
    %102 = arith.mulf %97, %101 : vector<8x64xf32>
    %103 = vector.broadcast %4 : vector<1x64xf32> to vector<8x64xf32>
    %104 = arith.mulf %102, %103 : vector<8x64xf32>
    %cst_38 = arith.constant dense<0.000000e+00> : vector<8xf32>
    %105 = vector.multi_reduction <add>, %104, %cst_38 [1] : vector<8x64xf32> to vector<8xf32>
    %106 = vector.shape_cast %105 : vector<8xf32> to vector<8x1xf32>
    %c2 = arith.constant 2 : index
    %c0_39 = arith.constant 0 : index
    %c0_40 = arith.constant 0 : index
    %107 = vector.load %arg0[%c2, %c0_39, %c0_40] : memref<8x8x2xf32, #tpu.memory_space<vmem>>, vector<1x8x2xf32>
    %108 = vector.shape_cast %107 : vector<1x8x2xf32> to vector<8x2xf32>
    %109 = vector.extract_strided_slice %108 {offsets = [0, 0], sizes = [8, 1], strides = [1, 1]} : vector<8x2xf32> to vector<8x1xf32>
    %110 = vector.broadcast %109 : vector<8x1xf32> to vector<8x256xf32>
    %111 = vector.broadcast %1 : vector<1x256xf32> to vector<8x256xf32>
    %112 = arith.mulf %110, %111 : vector<8x256xf32>
    %113 = vector.extract_strided_slice %108 {offsets = [0, 1], sizes = [8, 1], strides = [1, 1]} : vector<8x2xf32> to vector<8x1xf32>
    %114 = vector.broadcast %113 : vector<8x1xf32> to vector<8x256xf32>
    %115 = vector.broadcast %2 : vector<1x256xf32> to vector<8x256xf32>
    %116 = arith.mulf %114, %115 : vector<8x256xf32>
    %117 = arith.addf %112, %116 : vector<8x256xf32>
    %118 = vector.broadcast %3 : vector<1x256xf32> to vector<8x256xf32>
    %119 = arith.addf %117, %118 : vector<8x256xf32>
    %cst_41 = arith.constant dense<0.000000e+00> : vector<8x256xf32>
    %120 = tpu.matmul %102, %0, %cst_41 {dimension_numbers = #tpu.dot_dimension_numbers<[1], [0], [0], [1], [0, 0, 1, 1], [], []>} : vector<8x64xf32>, vector<64x256xf32>, vector<8x256xf32> -> vector<8x256xf32>
    %121 = arith.addf %119, %120 : vector<8x256xf32>
    %122 = vector.extract_strided_slice %121 {offsets = [0, 0], sizes = [8, 64], strides = [1, 1]} : vector<8x256xf32> to vector<8x64xf32>
    %cst_42 = arith.constant 5.000000e-01 : f32
    %123 = vector.broadcast %cst_42 : f32 to vector<8x64xf32>
    %124 = arith.mulf %123, %122 : vector<8x64xf32>
    %125 = math.tanh %124 : vector<8x64xf32>
    %cst_43 = arith.constant 5.000000e-01 : f32
    %126 = vector.broadcast %cst_43 : f32 to vector<8x64xf32>
    %127 = arith.mulf %126, %125 : vector<8x64xf32>
    %cst_44 = arith.constant 5.000000e-01 : f32
    %128 = vector.broadcast %cst_44 : f32 to vector<8x64xf32>
    %129 = arith.addf %127, %128 : vector<8x64xf32>
    %130 = vector.extract_strided_slice %121 {offsets = [0, 64], sizes = [8, 64], strides = [1, 1]} : vector<8x256xf32> to vector<8x64xf32>
    %cst_45 = arith.constant 5.000000e-01 : f32
    %131 = vector.broadcast %cst_45 : f32 to vector<8x64xf32>
    %132 = arith.mulf %131, %130 : vector<8x64xf32>
    %133 = math.tanh %132 : vector<8x64xf32>
    %cst_46 = arith.constant 5.000000e-01 : f32
    %134 = vector.broadcast %cst_46 : f32 to vector<8x64xf32>
    %135 = arith.mulf %134, %133 : vector<8x64xf32>
    %cst_47 = arith.constant 5.000000e-01 : f32
    %136 = vector.broadcast %cst_47 : f32 to vector<8x64xf32>
    %137 = arith.addf %135, %136 : vector<8x64xf32>
    %138 = vector.extract_strided_slice %121 {offsets = [0, 128], sizes = [8, 64], strides = [1, 1]} : vector<8x256xf32> to vector<8x64xf32>
    %139 = math.tanh %138 : vector<8x64xf32>
    %140 = vector.extract_strided_slice %121 {offsets = [0, 192], sizes = [8, 64], strides = [1, 1]} : vector<8x256xf32> to vector<8x64xf32>
    %cst_48 = arith.constant 5.000000e-01 : f32
    %141 = vector.broadcast %cst_48 : f32 to vector<8x64xf32>
    %142 = arith.mulf %141, %140 : vector<8x64xf32>
    %143 = math.tanh %142 : vector<8x64xf32>
    %cst_49 = arith.constant 5.000000e-01 : f32
    %144 = vector.broadcast %cst_49 : f32 to vector<8x64xf32>
    %145 = arith.mulf %144, %143 : vector<8x64xf32>
    %cst_50 = arith.constant 5.000000e-01 : f32
    %146 = vector.broadcast %cst_50 : f32 to vector<8x64xf32>
    %147 = arith.addf %145, %146 : vector<8x64xf32>
    %148 = arith.mulf %137, %100 : vector<8x64xf32>
    %149 = arith.mulf %129, %139 : vector<8x64xf32>
    %150 = arith.addf %148, %149 : vector<8x64xf32>
    %151 = math.tanh %150 : vector<8x64xf32>
    %152 = arith.mulf %147, %151 : vector<8x64xf32>
    %153 = vector.broadcast %4 : vector<1x64xf32> to vector<8x64xf32>
    %154 = arith.mulf %152, %153 : vector<8x64xf32>
    %cst_51 = arith.constant dense<0.000000e+00> : vector<8xf32>
    %155 = vector.multi_reduction <add>, %154, %cst_51 [1] : vector<8x64xf32> to vector<8xf32>
    %156 = vector.shape_cast %155 : vector<8xf32> to vector<8x1xf32>
    %c3 = arith.constant 3 : index
    %c0_52 = arith.constant 0 : index
    %c0_53 = arith.constant 0 : index
    %157 = vector.load %arg0[%c3, %c0_52, %c0_53] : memref<8x8x2xf32, #tpu.memory_space<vmem>>, vector<1x8x2xf32>
    %158 = vector.shape_cast %157 : vector<1x8x2xf32> to vector<8x2xf32>
    %159 = vector.extract_strided_slice %158 {offsets = [0, 0], sizes = [8, 1], strides = [1, 1]} : vector<8x2xf32> to vector<8x1xf32>
    %160 = vector.broadcast %159 : vector<8x1xf32> to vector<8x256xf32>
    %161 = vector.broadcast %1 : vector<1x256xf32> to vector<8x256xf32>
    %162 = arith.mulf %160, %161 : vector<8x256xf32>
    %163 = vector.extract_strided_slice %158 {offsets = [0, 1], sizes = [8, 1], strides = [1, 1]} : vector<8x2xf32> to vector<8x1xf32>
    %164 = vector.broadcast %163 : vector<8x1xf32> to vector<8x256xf32>
    %165 = vector.broadcast %2 : vector<1x256xf32> to vector<8x256xf32>
    %166 = arith.mulf %164, %165 : vector<8x256xf32>
    %167 = arith.addf %162, %166 : vector<8x256xf32>
    %168 = vector.broadcast %3 : vector<1x256xf32> to vector<8x256xf32>
    %169 = arith.addf %167, %168 : vector<8x256xf32>
    %cst_54 = arith.constant dense<0.000000e+00> : vector<8x256xf32>
    %170 = tpu.matmul %152, %0, %cst_54 {dimension_numbers = #tpu.dot_dimension_numbers<[1], [0], [0], [1], [0, 0, 1, 1], [], []>} : vector<8x64xf32>, vector<64x256xf32>, vector<8x256xf32> -> vector<8x256xf32>
    %171 = arith.addf %169, %170 : vector<8x256xf32>
    %172 = vector.extract_strided_slice %171 {offsets = [0, 0], sizes = [8, 64], strides = [1, 1]} : vector<8x256xf32> to vector<8x64xf32>
    %cst_55 = arith.constant 5.000000e-01 : f32
    %173 = vector.broadcast %cst_55 : f32 to vector<8x64xf32>
    %174 = arith.mulf %173, %172 : vector<8x64xf32>
    %175 = math.tanh %174 : vector<8x64xf32>
    %cst_56 = arith.constant 5.000000e-01 : f32
    %176 = vector.broadcast %cst_56 : f32 to vector<8x64xf32>
    %177 = arith.mulf %176, %175 : vector<8x64xf32>
    %cst_57 = arith.constant 5.000000e-01 : f32
    %178 = vector.broadcast %cst_57 : f32 to vector<8x64xf32>
    %179 = arith.addf %177, %178 : vector<8x64xf32>
    %180 = vector.extract_strided_slice %171 {offsets = [0, 64], sizes = [8, 64], strides = [1, 1]} : vector<8x256xf32> to vector<8x64xf32>
    %cst_58 = arith.constant 5.000000e-01 : f32
    %181 = vector.broadcast %cst_58 : f32 to vector<8x64xf32>
    %182 = arith.mulf %181, %180 : vector<8x64xf32>
    %183 = math.tanh %182 : vector<8x64xf32>
    %cst_59 = arith.constant 5.000000e-01 : f32
    %184 = vector.broadcast %cst_59 : f32 to vector<8x64xf32>
    %185 = arith.mulf %184, %183 : vector<8x64xf32>
    %cst_60 = arith.constant 5.000000e-01 : f32
    %186 = vector.broadcast %cst_60 : f32 to vector<8x64xf32>
    %187 = arith.addf %185, %186 : vector<8x64xf32>
    %188 = vector.extract_strided_slice %171 {offsets = [0, 128], sizes = [8, 64], strides = [1, 1]} : vector<8x256xf32> to vector<8x64xf32>
    %189 = math.tanh %188 : vector<8x64xf32>
    %190 = vector.extract_strided_slice %171 {offsets = [0, 192], sizes = [8, 64], strides = [1, 1]} : vector<8x256xf32> to vector<8x64xf32>
    %cst_61 = arith.constant 5.000000e-01 : f32
    %191 = vector.broadcast %cst_61 : f32 to vector<8x64xf32>
    %192 = arith.mulf %191, %190 : vector<8x64xf32>
    %193 = math.tanh %192 : vector<8x64xf32>
    %cst_62 = arith.constant 5.000000e-01 : f32
    %194 = vector.broadcast %cst_62 : f32 to vector<8x64xf32>
    %195 = arith.mulf %194, %193 : vector<8x64xf32>
    %cst_63 = arith.constant 5.000000e-01 : f32
    %196 = vector.broadcast %cst_63 : f32 to vector<8x64xf32>
    %197 = arith.addf %195, %196 : vector<8x64xf32>
    %198 = arith.mulf %187, %150 : vector<8x64xf32>
    %199 = arith.mulf %179, %189 : vector<8x64xf32>
    %200 = arith.addf %198, %199 : vector<8x64xf32>
    %201 = math.tanh %200 : vector<8x64xf32>
    %202 = arith.mulf %197, %201 : vector<8x64xf32>
    %203 = vector.broadcast %4 : vector<1x64xf32> to vector<8x64xf32>
    %204 = arith.mulf %202, %203 : vector<8x64xf32>
    %cst_64 = arith.constant dense<0.000000e+00> : vector<8xf32>
    %205 = vector.multi_reduction <add>, %204, %cst_64 [1] : vector<8x64xf32> to vector<8xf32>
    %206 = vector.shape_cast %205 : vector<8xf32> to vector<8x1xf32>
    %c4 = arith.constant 4 : index
    %c0_65 = arith.constant 0 : index
    %c0_66 = arith.constant 0 : index
    %207 = vector.load %arg0[%c4, %c0_65, %c0_66] : memref<8x8x2xf32, #tpu.memory_space<vmem>>, vector<1x8x2xf32>
    %208 = vector.shape_cast %207 : vector<1x8x2xf32> to vector<8x2xf32>
    %209 = vector.extract_strided_slice %208 {offsets = [0, 0], sizes = [8, 1], strides = [1, 1]} : vector<8x2xf32> to vector<8x1xf32>
    %210 = vector.broadcast %209 : vector<8x1xf32> to vector<8x256xf32>
    %211 = vector.broadcast %1 : vector<1x256xf32> to vector<8x256xf32>
    %212 = arith.mulf %210, %211 : vector<8x256xf32>
    %213 = vector.extract_strided_slice %208 {offsets = [0, 1], sizes = [8, 1], strides = [1, 1]} : vector<8x2xf32> to vector<8x1xf32>
    %214 = vector.broadcast %213 : vector<8x1xf32> to vector<8x256xf32>
    %215 = vector.broadcast %2 : vector<1x256xf32> to vector<8x256xf32>
    %216 = arith.mulf %214, %215 : vector<8x256xf32>
    %217 = arith.addf %212, %216 : vector<8x256xf32>
    %218 = vector.broadcast %3 : vector<1x256xf32> to vector<8x256xf32>
    %219 = arith.addf %217, %218 : vector<8x256xf32>
    %cst_67 = arith.constant dense<0.000000e+00> : vector<8x256xf32>
    %220 = tpu.matmul %202, %0, %cst_67 {dimension_numbers = #tpu.dot_dimension_numbers<[1], [0], [0], [1], [0, 0, 1, 1], [], []>} : vector<8x64xf32>, vector<64x256xf32>, vector<8x256xf32> -> vector<8x256xf32>
    %221 = arith.addf %219, %220 : vector<8x256xf32>
    %222 = vector.extract_strided_slice %221 {offsets = [0, 0], sizes = [8, 64], strides = [1, 1]} : vector<8x256xf32> to vector<8x64xf32>
    %cst_68 = arith.constant 5.000000e-01 : f32
    %223 = vector.broadcast %cst_68 : f32 to vector<8x64xf32>
    %224 = arith.mulf %223, %222 : vector<8x64xf32>
    %225 = math.tanh %224 : vector<8x64xf32>
    %cst_69 = arith.constant 5.000000e-01 : f32
    %226 = vector.broadcast %cst_69 : f32 to vector<8x64xf32>
    %227 = arith.mulf %226, %225 : vector<8x64xf32>
    %cst_70 = arith.constant 5.000000e-01 : f32
    %228 = vector.broadcast %cst_70 : f32 to vector<8x64xf32>
    %229 = arith.addf %227, %228 : vector<8x64xf32>
    %230 = vector.extract_strided_slice %221 {offsets = [0, 64], sizes = [8, 64], strides = [1, 1]} : vector<8x256xf32> to vector<8x64xf32>
    %cst_71 = arith.constant 5.000000e-01 : f32
    %231 = vector.broadcast %cst_71 : f32 to vector<8x64xf32>
    %232 = arith.mulf %231, %230 : vector<8x64xf32>
    %233 = math.tanh %232 : vector<8x64xf32>
    %cst_72 = arith.constant 5.000000e-01 : f32
    %234 = vector.broadcast %cst_72 : f32 to vector<8x64xf32>
    %235 = arith.mulf %234, %233 : vector<8x64xf32>
    %cst_73 = arith.constant 5.000000e-01 : f32
    %236 = vector.broadcast %cst_73 : f32 to vector<8x64xf32>
    %237 = arith.addf %235, %236 : vector<8x64xf32>
    %238 = vector.extract_strided_slice %221 {offsets = [0, 128], sizes = [8, 64], strides = [1, 1]} : vector<8x256xf32> to vector<8x64xf32>
    %239 = math.tanh %238 : vector<8x64xf32>
    %240 = vector.extract_strided_slice %221 {offsets = [0, 192], sizes = [8, 64], strides = [1, 1]} : vector<8x256xf32> to vector<8x64xf32>
    %cst_74 = arith.constant 5.000000e-01 : f32
    %241 = vector.broadcast %cst_74 : f32 to vector<8x64xf32>
    %242 = arith.mulf %241, %240 : vector<8x64xf32>
    %243 = math.tanh %242 : vector<8x64xf32>
    %cst_75 = arith.constant 5.000000e-01 : f32
    %244 = vector.broadcast %cst_75 : f32 to vector<8x64xf32>
    %245 = arith.mulf %244, %243 : vector<8x64xf32>
    %cst_76 = arith.constant 5.000000e-01 : f32
    %246 = vector.broadcast %cst_76 : f32 to vector<8x64xf32>
    %247 = arith.addf %245, %246 : vector<8x64xf32>
    %248 = arith.mulf %237, %200 : vector<8x64xf32>
    %249 = arith.mulf %229, %239 : vector<8x64xf32>
    %250 = arith.addf %248, %249 : vector<8x64xf32>
    %251 = math.tanh %250 : vector<8x64xf32>
    %252 = arith.mulf %247, %251 : vector<8x64xf32>
    %253 = vector.broadcast %4 : vector<1x64xf32> to vector<8x64xf32>
    %254 = arith.mulf %252, %253 : vector<8x64xf32>
    %cst_77 = arith.constant dense<0.000000e+00> : vector<8xf32>
    %255 = vector.multi_reduction <add>, %254, %cst_77 [1] : vector<8x64xf32> to vector<8xf32>
    %256 = vector.shape_cast %255 : vector<8xf32> to vector<8x1xf32>
    %c5 = arith.constant 5 : index
    %c0_78 = arith.constant 0 : index
    %c0_79 = arith.constant 0 : index
    %257 = vector.load %arg0[%c5, %c0_78, %c0_79] : memref<8x8x2xf32, #tpu.memory_space<vmem>>, vector<1x8x2xf32>
    %258 = vector.shape_cast %257 : vector<1x8x2xf32> to vector<8x2xf32>
    %259 = vector.extract_strided_slice %258 {offsets = [0, 0], sizes = [8, 1], strides = [1, 1]} : vector<8x2xf32> to vector<8x1xf32>
    %260 = vector.broadcast %259 : vector<8x1xf32> to vector<8x256xf32>
    %261 = vector.broadcast %1 : vector<1x256xf32> to vector<8x256xf32>
    %262 = arith.mulf %260, %261 : vector<8x256xf32>
    %263 = vector.extract_strided_slice %258 {offsets = [0, 1], sizes = [8, 1], strides = [1, 1]} : vector<8x2xf32> to vector<8x1xf32>
    %264 = vector.broadcast %263 : vector<8x1xf32> to vector<8x256xf32>
    %265 = vector.broadcast %2 : vector<1x256xf32> to vector<8x256xf32>
    %266 = arith.mulf %264, %265 : vector<8x256xf32>
    %267 = arith.addf %262, %266 : vector<8x256xf32>
    %268 = vector.broadcast %3 : vector<1x256xf32> to vector<8x256xf32>
    %269 = arith.addf %267, %268 : vector<8x256xf32>
    %cst_80 = arith.constant dense<0.000000e+00> : vector<8x256xf32>
    %270 = tpu.matmul %252, %0, %cst_80 {dimension_numbers = #tpu.dot_dimension_numbers<[1], [0], [0], [1], [0, 0, 1, 1], [], []>} : vector<8x64xf32>, vector<64x256xf32>, vector<8x256xf32> -> vector<8x256xf32>
    %271 = arith.addf %269, %270 : vector<8x256xf32>
    %272 = vector.extract_strided_slice %271 {offsets = [0, 0], sizes = [8, 64], strides = [1, 1]} : vector<8x256xf32> to vector<8x64xf32>
    %cst_81 = arith.constant 5.000000e-01 : f32
    %273 = vector.broadcast %cst_81 : f32 to vector<8x64xf32>
    %274 = arith.mulf %273, %272 : vector<8x64xf32>
    %275 = math.tanh %274 : vector<8x64xf32>
    %cst_82 = arith.constant 5.000000e-01 : f32
    %276 = vector.broadcast %cst_82 : f32 to vector<8x64xf32>
    %277 = arith.mulf %276, %275 : vector<8x64xf32>
    %cst_83 = arith.constant 5.000000e-01 : f32
    %278 = vector.broadcast %cst_83 : f32 to vector<8x64xf32>
    %279 = arith.addf %277, %278 : vector<8x64xf32>
    %280 = vector.extract_strided_slice %271 {offsets = [0, 64], sizes = [8, 64], strides = [1, 1]} : vector<8x256xf32> to vector<8x64xf32>
    %cst_84 = arith.constant 5.000000e-01 : f32
    %281 = vector.broadcast %cst_84 : f32 to vector<8x64xf32>
    %282 = arith.mulf %281, %280 : vector<8x64xf32>
    %283 = math.tanh %282 : vector<8x64xf32>
    %cst_85 = arith.constant 5.000000e-01 : f32
    %284 = vector.broadcast %cst_85 : f32 to vector<8x64xf32>
    %285 = arith.mulf %284, %283 : vector<8x64xf32>
    %cst_86 = arith.constant 5.000000e-01 : f32
    %286 = vector.broadcast %cst_86 : f32 to vector<8x64xf32>
    %287 = arith.addf %285, %286 : vector<8x64xf32>
    %288 = vector.extract_strided_slice %271 {offsets = [0, 128], sizes = [8, 64], strides = [1, 1]} : vector<8x256xf32> to vector<8x64xf32>
    %289 = math.tanh %288 : vector<8x64xf32>
    %290 = vector.extract_strided_slice %271 {offsets = [0, 192], sizes = [8, 64], strides = [1, 1]} : vector<8x256xf32> to vector<8x64xf32>
    %cst_87 = arith.constant 5.000000e-01 : f32
    %291 = vector.broadcast %cst_87 : f32 to vector<8x64xf32>
    %292 = arith.mulf %291, %290 : vector<8x64xf32>
    %293 = math.tanh %292 : vector<8x64xf32>
    %cst_88 = arith.constant 5.000000e-01 : f32
    %294 = vector.broadcast %cst_88 : f32 to vector<8x64xf32>
    %295 = arith.mulf %294, %293 : vector<8x64xf32>
    %cst_89 = arith.constant 5.000000e-01 : f32
    %296 = vector.broadcast %cst_89 : f32 to vector<8x64xf32>
    %297 = arith.addf %295, %296 : vector<8x64xf32>
    %298 = arith.mulf %287, %250 : vector<8x64xf32>
    %299 = arith.mulf %279, %289 : vector<8x64xf32>
    %300 = arith.addf %298, %299 : vector<8x64xf32>
    %301 = math.tanh %300 : vector<8x64xf32>
    %302 = arith.mulf %297, %301 : vector<8x64xf32>
    %303 = vector.broadcast %4 : vector<1x64xf32> to vector<8x64xf32>
    %304 = arith.mulf %302, %303 : vector<8x64xf32>
    %cst_90 = arith.constant dense<0.000000e+00> : vector<8xf32>
    %305 = vector.multi_reduction <add>, %304, %cst_90 [1] : vector<8x64xf32> to vector<8xf32>
    %306 = vector.shape_cast %305 : vector<8xf32> to vector<8x1xf32>
    %c6 = arith.constant 6 : index
    %c0_91 = arith.constant 0 : index
    %c0_92 = arith.constant 0 : index
    %307 = vector.load %arg0[%c6, %c0_91, %c0_92] : memref<8x8x2xf32, #tpu.memory_space<vmem>>, vector<1x8x2xf32>
    %308 = vector.shape_cast %307 : vector<1x8x2xf32> to vector<8x2xf32>
    %309 = vector.extract_strided_slice %308 {offsets = [0, 0], sizes = [8, 1], strides = [1, 1]} : vector<8x2xf32> to vector<8x1xf32>
    %310 = vector.broadcast %309 : vector<8x1xf32> to vector<8x256xf32>
    %311 = vector.broadcast %1 : vector<1x256xf32> to vector<8x256xf32>
    %312 = arith.mulf %310, %311 : vector<8x256xf32>
    %313 = vector.extract_strided_slice %308 {offsets = [0, 1], sizes = [8, 1], strides = [1, 1]} : vector<8x2xf32> to vector<8x1xf32>
    %314 = vector.broadcast %313 : vector<8x1xf32> to vector<8x256xf32>
    %315 = vector.broadcast %2 : vector<1x256xf32> to vector<8x256xf32>
    %316 = arith.mulf %314, %315 : vector<8x256xf32>
    %317 = arith.addf %312, %316 : vector<8x256xf32>
    %318 = vector.broadcast %3 : vector<1x256xf32> to vector<8x256xf32>
    %319 = arith.addf %317, %318 : vector<8x256xf32>
    %cst_93 = arith.constant dense<0.000000e+00> : vector<8x256xf32>
    %320 = tpu.matmul %302, %0, %cst_93 {dimension_numbers = #tpu.dot_dimension_numbers<[1], [0], [0], [1], [0, 0, 1, 1], [], []>} : vector<8x64xf32>, vector<64x256xf32>, vector<8x256xf32> -> vector<8x256xf32>
    %321 = arith.addf %319, %320 : vector<8x256xf32>
    %322 = vector.extract_strided_slice %321 {offsets = [0, 0], sizes = [8, 64], strides = [1, 1]} : vector<8x256xf32> to vector<8x64xf32>
    %cst_94 = arith.constant 5.000000e-01 : f32
    %323 = vector.broadcast %cst_94 : f32 to vector<8x64xf32>
    %324 = arith.mulf %323, %322 : vector<8x64xf32>
    %325 = math.tanh %324 : vector<8x64xf32>
    %cst_95 = arith.constant 5.000000e-01 : f32
    %326 = vector.broadcast %cst_95 : f32 to vector<8x64xf32>
    %327 = arith.mulf %326, %325 : vector<8x64xf32>
    %cst_96 = arith.constant 5.000000e-01 : f32
    %328 = vector.broadcast %cst_96 : f32 to vector<8x64xf32>
    %329 = arith.addf %327, %328 : vector<8x64xf32>
    %330 = vector.extract_strided_slice %321 {offsets = [0, 64], sizes = [8, 64], strides = [1, 1]} : vector<8x256xf32> to vector<8x64xf32>
    %cst_97 = arith.constant 5.000000e-01 : f32
    %331 = vector.broadcast %cst_97 : f32 to vector<8x64xf32>
    %332 = arith.mulf %331, %330 : vector<8x64xf32>
    %333 = math.tanh %332 : vector<8x64xf32>
    %cst_98 = arith.constant 5.000000e-01 : f32
    %334 = vector.broadcast %cst_98 : f32 to vector<8x64xf32>
    %335 = arith.mulf %334, %333 : vector<8x64xf32>
    %cst_99 = arith.constant 5.000000e-01 : f32
    %336 = vector.broadcast %cst_99 : f32 to vector<8x64xf32>
    %337 = arith.addf %335, %336 : vector<8x64xf32>
    %338 = vector.extract_strided_slice %321 {offsets = [0, 128], sizes = [8, 64], strides = [1, 1]} : vector<8x256xf32> to vector<8x64xf32>
    %339 = math.tanh %338 : vector<8x64xf32>
    %340 = vector.extract_strided_slice %321 {offsets = [0, 192], sizes = [8, 64], strides = [1, 1]} : vector<8x256xf32> to vector<8x64xf32>
    %cst_100 = arith.constant 5.000000e-01 : f32
    %341 = vector.broadcast %cst_100 : f32 to vector<8x64xf32>
    %342 = arith.mulf %341, %340 : vector<8x64xf32>
    %343 = math.tanh %342 : vector<8x64xf32>
    %cst_101 = arith.constant 5.000000e-01 : f32
    %344 = vector.broadcast %cst_101 : f32 to vector<8x64xf32>
    %345 = arith.mulf %344, %343 : vector<8x64xf32>
    %cst_102 = arith.constant 5.000000e-01 : f32
    %346 = vector.broadcast %cst_102 : f32 to vector<8x64xf32>
    %347 = arith.addf %345, %346 : vector<8x64xf32>
    %348 = arith.mulf %337, %300 : vector<8x64xf32>
    %349 = arith.mulf %329, %339 : vector<8x64xf32>
    %350 = arith.addf %348, %349 : vector<8x64xf32>
    %351 = math.tanh %350 : vector<8x64xf32>
    %352 = arith.mulf %347, %351 : vector<8x64xf32>
    %353 = vector.broadcast %4 : vector<1x64xf32> to vector<8x64xf32>
    %354 = arith.mulf %352, %353 : vector<8x64xf32>
    %cst_103 = arith.constant dense<0.000000e+00> : vector<8xf32>
    %355 = vector.multi_reduction <add>, %354, %cst_103 [1] : vector<8x64xf32> to vector<8xf32>
    %356 = vector.shape_cast %355 : vector<8xf32> to vector<8x1xf32>
    %c7 = arith.constant 7 : index
    %c0_104 = arith.constant 0 : index
    %c0_105 = arith.constant 0 : index
    %357 = vector.load %arg0[%c7, %c0_104, %c0_105] : memref<8x8x2xf32, #tpu.memory_space<vmem>>, vector<1x8x2xf32>
    %358 = vector.shape_cast %357 : vector<1x8x2xf32> to vector<8x2xf32>
    %359 = vector.extract_strided_slice %358 {offsets = [0, 0], sizes = [8, 1], strides = [1, 1]} : vector<8x2xf32> to vector<8x1xf32>
    %360 = vector.broadcast %359 : vector<8x1xf32> to vector<8x256xf32>
    %361 = vector.broadcast %1 : vector<1x256xf32> to vector<8x256xf32>
    %362 = arith.mulf %360, %361 : vector<8x256xf32>
    %363 = vector.extract_strided_slice %358 {offsets = [0, 1], sizes = [8, 1], strides = [1, 1]} : vector<8x2xf32> to vector<8x1xf32>
    %364 = vector.broadcast %363 : vector<8x1xf32> to vector<8x256xf32>
    %365 = vector.broadcast %2 : vector<1x256xf32> to vector<8x256xf32>
    %366 = arith.mulf %364, %365 : vector<8x256xf32>
    %367 = arith.addf %362, %366 : vector<8x256xf32>
    %368 = vector.broadcast %3 : vector<1x256xf32> to vector<8x256xf32>
    %369 = arith.addf %367, %368 : vector<8x256xf32>
    %cst_106 = arith.constant dense<0.000000e+00> : vector<8x256xf32>
    %370 = tpu.matmul %352, %0, %cst_106 {dimension_numbers = #tpu.dot_dimension_numbers<[1], [0], [0], [1], [0, 0, 1, 1], [], []>} : vector<8x64xf32>, vector<64x256xf32>, vector<8x256xf32> -> vector<8x256xf32>
    %371 = arith.addf %369, %370 : vector<8x256xf32>
    %372 = vector.extract_strided_slice %371 {offsets = [0, 0], sizes = [8, 64], strides = [1, 1]} : vector<8x256xf32> to vector<8x64xf32>
    %cst_107 = arith.constant 5.000000e-01 : f32
    %373 = vector.broadcast %cst_107 : f32 to vector<8x64xf32>
    %374 = arith.mulf %373, %372 : vector<8x64xf32>
    %375 = math.tanh %374 : vector<8x64xf32>
    %cst_108 = arith.constant 5.000000e-01 : f32
    %376 = vector.broadcast %cst_108 : f32 to vector<8x64xf32>
    %377 = arith.mulf %376, %375 : vector<8x64xf32>
    %cst_109 = arith.constant 5.000000e-01 : f32
    %378 = vector.broadcast %cst_109 : f32 to vector<8x64xf32>
    %379 = arith.addf %377, %378 : vector<8x64xf32>
    %380 = vector.extract_strided_slice %371 {offsets = [0, 64], sizes = [8, 64], strides = [1, 1]} : vector<8x256xf32> to vector<8x64xf32>
    %cst_110 = arith.constant 5.000000e-01 : f32
    %381 = vector.broadcast %cst_110 : f32 to vector<8x64xf32>
    %382 = arith.mulf %381, %380 : vector<8x64xf32>
    %383 = math.tanh %382 : vector<8x64xf32>
    %cst_111 = arith.constant 5.000000e-01 : f32
    %384 = vector.broadcast %cst_111 : f32 to vector<8x64xf32>
    %385 = arith.mulf %384, %383 : vector<8x64xf32>
    %cst_112 = arith.constant 5.000000e-01 : f32
    %386 = vector.broadcast %cst_112 : f32 to vector<8x64xf32>
    %387 = arith.addf %385, %386 : vector<8x64xf32>
    %388 = vector.extract_strided_slice %371 {offsets = [0, 128], sizes = [8, 64], strides = [1, 1]} : vector<8x256xf32> to vector<8x64xf32>
    %389 = math.tanh %388 : vector<8x64xf32>
    %390 = vector.extract_strided_slice %371 {offsets = [0, 192], sizes = [8, 64], strides = [1, 1]} : vector<8x256xf32> to vector<8x64xf32>
    %cst_113 = arith.constant 5.000000e-01 : f32
    %391 = vector.broadcast %cst_113 : f32 to vector<8x64xf32>
    %392 = arith.mulf %391, %390 : vector<8x64xf32>
    %393 = math.tanh %392 : vector<8x64xf32>
    %cst_114 = arith.constant 5.000000e-01 : f32
    %394 = vector.broadcast %cst_114 : f32 to vector<8x64xf32>
    %395 = arith.mulf %394, %393 : vector<8x64xf32>
    %cst_115 = arith.constant 5.000000e-01 : f32
    %396 = vector.broadcast %cst_115 : f32 to vector<8x64xf32>
    %397 = arith.addf %395, %396 : vector<8x64xf32>
    %398 = arith.mulf %387, %350 : vector<8x64xf32>
    %399 = arith.mulf %379, %389 : vector<8x64xf32>
    %400 = arith.addf %398, %399 : vector<8x64xf32>
    %401 = math.tanh %400 : vector<8x64xf32>
    %402 = arith.mulf %397, %401 : vector<8x64xf32>
    %403 = vector.broadcast %4 : vector<1x64xf32> to vector<8x64xf32>
    %404 = arith.mulf %402, %403 : vector<8x64xf32>
    %cst_116 = arith.constant dense<0.000000e+00> : vector<8xf32>
    %405 = vector.multi_reduction <add>, %404, %cst_116 [1] : vector<8x64xf32> to vector<8xf32>
    %406 = vector.shape_cast %405 : vector<8xf32> to vector<8x1xf32>
    %407 = tpu.concatenate %56, %106, %156, %206, %256, %306, %356, %406 in 1 : vector<8x1xf32>, vector<8x1xf32>, vector<8x1xf32>, vector<8x1xf32>, vector<8x1xf32>, vector<8x1xf32>, vector<8x1xf32>, vector<8x1xf32> -> vector<8x8xf32>
    %c0_117 = arith.constant 0 : index
    %c0_118 = arith.constant 0 : index
    %408 = vector.load %arg7[%c0_117, %c0_118] : memref<1x1xf32, #tpu.memory_space<vmem>>, vector<1x1xf32>
    %409 = vector.broadcast %408 : vector<1x1xf32> to vector<8x8xf32>
    %410 = arith.addf %407, %409 : vector<8x8xf32>
    %c0_119 = arith.constant 0 : index
    %c0_120 = arith.constant 0 : index
    %411 = vector.load %arg8[%c0_119, %c0_120] : memref<8x8xf32, #tpu.memory_space<vmem>>, vector<8x8xf32>
    tpu.vector_store %arg8[%c0_119, %c0_120], %410 {strides = array<i32>} : memref<8x8xf32, #tpu.memory_space<vmem>>, vector<8x8xf32>,
    return
  }
}

</mosaic_0001>

<llo_original>
// kernel: lstm_forward.1
$region0: #{lstm_forward.1}
  #allocation0 [shape = 'u32[]', space=smem, size = 0x4, offset = 0x4, fixed_abs, tag = 'smem constant byte address 0x4 - core index']
  #allocation1 [shape = 'u32[144,128]{1,0:T(1,128)}', space=vmem, size = 0x12000, scoped, tag = 'internal scratch']
  #allocation2 [shape = 'f32[1,1]{1,0:T(1,128)S(1)}', space=vmem, size = 0x200, scoped, tag = 'scoped memory for lstm_forward.1']
  %s0 = inlined_call_operand.vmem [shape: f32[8,8,2], index: 0, kind: input, shape index: {}]
  %s1 = inlined_call_operand.vmem [shape: f32[8,64], index: 1, kind: input, shape index: {}]
  %s2 = inlined_call_operand.vmem [shape: f32[8,64], index: 2, kind: input, shape index: {}]
  %s3 = inlined_call_operand.vmem [shape: f32[2,256], index: 3, kind: input, shape index: {}]
  %s4 = inlined_call_operand.vmem [shape: f32[1,256], index: 4, kind: input, shape index: {}]
  %s5 = inlined_call_operand.vmem [shape: f32[64,256], index: 5, kind: input, shape index: {}]
  %s6 = inlined_call_operand.vmem [shape: f32[1,64], index: 6, kind: input, shape index: {}]
  %s7 = inlined_call_operand.<no memory space> [shape: f32[1,1], index: 7, kind: input, shape index: {}]
  %s8 = inlined_call_operand.vmem [shape: f32[8,8], index: 8, kind: output, shape index: {}]
  %s9 = sld [smem:[#allocation0]]
  $region42: #{lstm_forward.1} parent=0
    _
  %s11 = ssub.s32 1, %s9
  %s12 = scalar_select 0, %s11, %s9
  %v13 = vstv %s7
  %14 = vst [vmem:[#allocation2] sm:$0x1] %v13
  // Predicated region
  $region2: #{lstm_forward.1} parent=0 // pred_check
    _
  $region3: #{lstm_forward.1} parent=0 // pred_check_branch
    %16 = sbr.rel (0) target = $region5
  $region4: #{lstm_forward.1} parent=0 // pred_region
    _
  $region5: #{lstm_forward.1} parent=0 // pred_fallthru
    _
  // Predicated region
  $region6: #{lstm_forward.1} parent=0 // pred_check
    _
  $region7: #{lstm_forward.1} parent=0 // pred_check_branch
    %18 = sbr.rel (0) target = $region9
  $region8: #{lstm_forward.1} parent=0 // pred_region
    _
  $region9: #{lstm_forward.1} parent=0 // pred_fallthru
    _
  // Predicated region
  $region10: #{lstm_forward.1} parent=0 // pred_check
    _
  $region11: #{lstm_forward.1} parent=0 // pred_check_branch
    %20 = sbr.rel (0) target = $region13
  $region12: #{lstm_forward.1} parent=0 // pred_region
    _
  $region13: #{lstm_forward.1} parent=0 // pred_fallthru
    _
  // Predicated region
  $region14: #{lstm_forward.1} parent=0 // pred_check
    _
  $region15: #{lstm_forward.1} parent=0 // pred_check_branch
    %22 = sbr.rel (0) target = $region17
  $region16: #{lstm_forward.1} parent=0 // pred_region
    _
  $region17: #{lstm_forward.1} parent=0 // pred_fallthru
    _
  // Predicated region
  $region18: #{lstm_forward.1} parent=0 // pred_check
    _
  $region19: #{lstm_forward.1} parent=0 // pred_check_branch
    %24 = sbr.rel (0) target = $region21
  $region20: #{lstm_forward.1} parent=0 // pred_region
    _
  $region21: #{lstm_forward.1} parent=0 // pred_fallthru
    _
  // Predicated region
  $region22: #{lstm_forward.1} parent=0 // pred_check
    _
  $region23: #{lstm_forward.1} parent=0 // pred_check_branch
    %26 = sbr.rel (0) target = $region25
  $region24: #{lstm_forward.1} parent=0 // pred_region
    _
  $region25: #{lstm_forward.1} parent=0 // pred_fallthru
    _
  // Predicated region
  $region26: #{lstm_forward.1} parent=0 // pred_check
    _
  $region27: #{lstm_forward.1} parent=0 // pred_check_branch
    %28 = sbr.rel (0) target = $region29
  $region28: #{lstm_forward.1} parent=0 // pred_region
    _
  $region29: #{lstm_forward.1} parent=0 // pred_fallthru
    _
  // Predicated region
  $region30: #{lstm_forward.1} parent=0 // pred_check
    _
  $region31: #{lstm_forward.1} parent=0 // pred_check_branch
    %30 = sbr.rel (0) target = $region33
  $region32: #{lstm_forward.1} parent=0 // pred_region
    _
  $region33: #{lstm_forward.1} parent=0 // pred_fallthru
    _
  %v31 = vld [vmem:[%s5] sm:$0xff]
  %v32 = vld [vmem:[%s5 + $0x8] sm:$0xff]
  %v33 = vld [vmem:[%s5 + $0x10] sm:$0xff]
  %v34 = vld [vmem:[%s5 + $0x18] sm:$0xff]
  %v35 = vld [vmem:[%s5 + $0x20] sm:$0xff]
  %v36 = vld [vmem:[%s5 + $0x28] sm:$0xff]
  %v37 = vld [vmem:[%s5 + $0x30] sm:$0xff]
  %v38 = vld [vmem:[%s5 + $0x38] sm:$0xff]
  %v39 = vld [vmem:[%s5 + $0x40] sm:$0xff]
  %v40 = vld [vmem:[%s5 + $0x48] sm:$0xff]
  %v41 = vld [vmem:[%s5 + $0x50] sm:$0xff]
  %v42 = vld [vmem:[%s5 + $0x58] sm:$0xff]
  %v43 = vld [vmem:[%s5 + $0x60] sm:$0xff]
  %v44 = vld [vmem:[%s5 + $0x68] sm:$0xff]
  %v45 = vld [vmem:[%s5 + $0x70] sm:$0xff]
  %v46 = vld [vmem:[%s5 + $0x78] sm:$0xff]
  %v47 = vld [vmem:[%s3] ss:$2 sm:$0x3]
  %s48 = scalar_lea.vmem %s3, 1
  %v49 = vld [vmem:[%s48] ss:$2 sm:$0x3]
  %v50 = vld [vmem:[%s4] sm:$0x3]
  %v51 = vld [vmem:[%s6] sm:$0x1]
  %v52 = vld [vmem:[%s1] sm:$0xff]
  %v53 = vld [vmem:[%s2] sm:$0xff]
  %v54 = vld [vmem:[%s0] sm:$0xff]
  %56 = vset.pattern.permute.xlu0 0
  %57 = vperm.xlu0 %56, %v54
  %v58 = vpop.permute.xlu0 %57
  %v61 = vlaneseq
  %v62 = vshrl.u32 %v61, 7
  %v63 = vsub.s32 0, %v62
  %v64 = vrot.slane %v47, %v63
  %v65 = vlaneseq
  %v66 = vshrl.u32 %v65, 7
  %v67 = vsub.s32 1, %v66
  %v68 = vrot.slane %v47, %v67
  %v71 = vmul.f32 %v58, %v64
  %v72 = vmul.f32 %v58, %v68
  %73 = vset.pattern.permute.xlu0 1
  %74 = vperm.xlu0 %73, %v54
  %v75 = vpop.permute.xlu0 %74
  %v78 = vlaneseq
  %v79 = vshrl.u32 %v78, 7
  %v80 = vsub.s32 0, %v79
  %v81 = vrot.slane %v49, %v80
  %v82 = vlaneseq
  %v83 = vshrl.u32 %v82, 7
  %v84 = vsub.s32 1, %v83
  %v85 = vrot.slane %v49, %v84
  %v88 = vmul.f32 %v75, %v81
  %v89 = vmul.f32 %v75, %v85
  %v90 = vadd.f32 %v71, %v88
  %v91 = vadd.f32 %v72, %v89
  %v93 = vlaneseq
  %v94 = vshrl.u32 %v93, 7
  %v95 = vsub.s32 0, %v94
  %v96 = vrot.slane %v50, %v95
  %v97 = vlaneseq
  %v98 = vshrl.u32 %v97, 7
  %v99 = vsub.s32 1, %v98
  %v100 = vrot.slane %v50, %v99
  %v103 = vadd.f32 %v90, %v96
  %v104 = vadd.f32 %v91, %v100
  %vm105 = vcmask 523264
  %v107 = vsel %vm105, %v52, 0
  %109 = vmatprep.subr.mxu0 %v32
  %110 = vmatpush1.msra.mxu0 %v31
  %111 = vmatprep.subr.mxu0 %v34
  %112 = vmatpush1.msra.mxu0 %v33
  %113 = vmatprep.subr.mxu0 %v36
  %114 = vmatpush1.msra.mxu0 %v35
  %115 = vmatprep.subr.mxu0 %v38
  %116 = vmatpush1.msra.mxu0 %v37
  %117 = vmatprep.subr.mxu0 %v40
  %118 = vmatpush1.msra.mxu0 %v39
  %119 = vmatprep.subr.mxu0 %v42
  %120 = vmatpush1.msra.mxu0 %v41
  %121 = vmatprep.subr.mxu0 %v44
  %122 = vmatpush1.msra.mxu0 %v43
  %123 = vmatprep.subr.mxu0 %v46
  %124 = vmatpush1.msra.mxu0 %v45
  %125 = vmatprep.subr.mxu0 0.0
  %126 = vmatpush1.msra.mxu0 0.0
  %127 = vmatprep.subr.mxu0 0.0
  %128 = vmatpush1.msra.mxu0 0.0
  %129 = vmatprep.subr.mxu0 0.0
  %130 = vmatpush1.msra.mxu0 0.0
  %131 = vmatprep.subr.mxu0 0.0
  %132 = vmatpush1.msra.mxu0 0.0
  %133 = vmatprep.subr.mxu0 0.0
  %134 = vmatpush1.msra.mxu0 0.0
  %135 = vmatprep.subr.mxu0 0.0
  %136 = vmatpush1.msra.mxu0 0.0
  %137 = vmatprep.subr.mxu0 0.0
  %138 = vmatpush1.msra.mxu0 0.0
  %139 = vmatprep.subr.mxu0 0.0
  %140 = vmatpush1.msra.mxu0 0.0
  %141 = vmatprep.subr.mxu0 0.0
  %142 = vmatpush1.msra.mxu0 0.0
  %143 = vmatprep.subr.mxu0 0.0
  %144 = vmatpush1.msra.mxu0 0.0
  %145 = vmatprep.subr.mxu0 0.0
  %146 = vmatpush1.msra.mxu0 0.0
  %147 = vmatprep.subr.mxu0 0.0
  %148 = vmatpush1.msra.mxu0 0.0
  %149 = vmatprep.subr.mxu0 0.0
  %150 = vmatpush1.msra.mxu0 0.0
  %151 = vmatprep.subr.mxu0 0.0
  %152 = vmatpush1.msra.mxu0 0.0
  %153 = vmatprep.subr.mxu0 0.0
  %154 = vmatpush1.msra.mxu0 0.0
  %155 = vmatprep.subr.mxu0 0.0
  %156 = vmatpush1.msra.mxu0 0.0
  %157 = vmatprep.subr.mxu0 0.0
  %158 = vmatpush1.msra.mxu0 0.0
  %159 = vmatprep.subr.mxu0 0.0
  %160 = vmatpush1.msra.mxu0 0.0
  %161 = vmatprep.subr.mxu0 0.0
  %162 = vmatpush1.msra.mxu0 0.0
  %163 = vmatprep.subr.mxu0 0.0
  %164 = vmatpush1.msra.mxu0 0.0
  %165 = vmatprep.subr.mxu0 0.0
  %166 = vmatpush1.msra.mxu0 0.0
  %167 = vmatprep.subr.mxu0 0.0
  %168 = vmatpush1.msra.mxu0 0.0
  %169 = vmatprep.subr.mxu0 0.0
  %170 = vmatpush1.msra.mxu0 0.0
  %171 = vmatprep.subr.mxu0 0.0
  %172 = vmatpush1.msra.mxu0 0.0
  %173 = vmatprep.mubr.f32.mxu0 0.0
  %174 = vmatmul.mubr.f32.gmra.mrb[0].mxu0 %v107
  %v175 = vpop.f32.mrb[0].mxu0
  %v176 = vadd.f32 0.0, %v175
  %v177 = vpop.f32.mrb[0].mxu0
  %v178 = vadd.f32 0.0, %v177
  %179 = vdwg.mxu0
  %v180 = vadd.f32 %v103, %v176
  %v181 = vadd.f32 %v104, %v178
  %v182 = vmul.f32 %v180, 0.5
  %v183 = vtanh.pop %v182
  %v184 = vmul.f32 %v183, 0.5
  %v185 = vadd.f32 %v184, 0.5
  %v186 = vtanh.pop %v181
  %v187 = vmul.f32 %v181, 0.5
  %v188 = vtanh.pop %v187
  %v189 = vmul.f32 %v188, 0.5
  %v190 = vadd.f32 %v189, 0.5
  %192 = vrot.lane.b32.xlu0 %v53, 64
  %v193 = vpop.permute.xlu0 %192
  %v195 = vmul.f32 %v185, %v193
  %v196 = vmul.f32 %v185, %v186
  %198 = vrot.lane.b32.xlu0 %v196, 64
  %v199 = vpop.permute.xlu0 %198
  %v201 = vadd.f32 %v195, %v199
  %v202 = vtanh.pop %v201
  %v203 = vmul.f32 %v190, %v202
  %v205 = vlaneseq
  %v206 = vshrl.u32 %v205, 7
  %v207 = vsub.s32 0, %v206
  %v208 = vrot.slane %v51, %v207
  %209 = vrot.lane.b32.xlu0 %v208, 64
  %v210 = vpop.permute.xlu0 %209
  %v212 = vmul.f32 %v203, %v210
  %214 = vrot.lane.b32.xlu0 %v212, 64
  %v215 = vpop.permute.xlu0 %214
  %v217 = vsel %vm105, %v215, 0.0
  %218 = vadd.xlane.f32.xlu0 %v217
  %v219 = vpop.xlane.xlu0 %218
  %s220 = scalar_lea.vmem %s0, 8
  %v221 = vld [vmem:[%s220] sm:$0xff]
  %223 = vset.pattern.permute.xlu0 0
  %224 = vperm.xlu0 %223, %v221
  %v225 = vpop.permute.xlu0 %224
  %v227 = vmul.f32 %v225, %v64
  %v228 = vmul.f32 %v225, %v68
  %229 = vset.pattern.permute.xlu0 1
  %230 = vperm.xlu0 %229, %v221
  %v231 = vpop.permute.xlu0 %230
  %v233 = vmul.f32 %v231, %v81
  %v234 = vmul.f32 %v231, %v85
  %v235 = vadd.f32 %v227, %v233
  %v236 = vadd.f32 %v228, %v234
  %v237 = vadd.f32 %v235, %v96
  %v238 = vadd.f32 %v236, %v100
  %240 = vrot.lane.b32.xlu0 %v203, 64
  %v241 = vpop.permute.xlu0 %240
  %v242 = vsel %vm105, %v241, 0
  %244 = vmatprep.subr.mxu0 %v32
  %245 = vmatpush1.msra.mxu0 %v31
  %246 = vmatprep.subr.mxu0 %v34
  %247 = vmatpush1.msra.mxu0 %v33
  %248 = vmatprep.subr.mxu0 %v36
  %249 = vmatpush1.msra.mxu0 %v35
  %250 = vmatprep.subr.mxu0 %v38
  %251 = vmatpush1.msra.mxu0 %v37
  %252 = vmatprep.subr.mxu0 %v40
  %253 = vmatpush1.msra.mxu0 %v39
  %254 = vmatprep.subr.mxu0 %v42
  %255 = vmatpush1.msra.mxu0 %v41
  %256 = vmatprep.subr.mxu0 %v44
  %257 = vmatpush1.msra.mxu0 %v43
  %258 = vmatprep.subr.mxu0 %v46
  %259 = vmatpush1.msra.mxu0 %v45
  %260 = vmatprep.subr.mxu0 0.0
  %261 = vmatpush1.msra.mxu0 0.0
  %262 = vmatprep.subr.mxu0 0.0
  %263 = vmatpush1.msra.mxu0 0.0
  %264 = vmatprep.subr.mxu0 0.0
  %265 = vmatpush1.msra.mxu0 0.0
  %266 = vmatprep.subr.mxu0 0.0
  %267 = vmatpush1.msra.mxu0 0.0
  %268 = vmatprep.subr.mxu0 0.0
  %269 = vmatpush1.msra.mxu0 0.0
  %270 = vmatprep.subr.mxu0 0.0
  %271 = vmatpush1.msra.mxu0 0.0
  %272 = vmatprep.subr.mxu0 0.0
  %273 = vmatpush1.msra.mxu0 0.0
  %274 = vmatprep.subr.mxu0 0.0
  %275 = vmatpush1.msra.mxu0 0.0
  %276 = vmatprep.subr.mxu0 0.0
  %277 = vmatpush1.msra.mxu0 0.0
  %278 = vmatprep.subr.mxu0 0.0
  %279 = vmatpush1.msra.mxu0 0.0
  %280 = vmatprep.subr.mxu0 0.0
  %281 = vmatpush1.msra.mxu0 0.0
  %282 = vmatprep.subr.mxu0 0.0
  %283 = vmatpush1.msra.mxu0 0.0
  %284 = vmatprep.subr.mxu0 0.0
  %285 = vmatpush1.msra.mxu0 0.0
  %286 = vmatprep.subr.mxu0 0.0
  %287 = vmatpush1.msra.mxu0 0.0
  %288 = vmatprep.subr.mxu0 0.0
  %289 = vmatpush1.msra.mxu0 0.0
  %290 = vmatprep.subr.mxu0 0.0
  %291 = vmatpush1.msra.mxu0 0.0
  %292 = vmatprep.subr.mxu0 0.0
  %293 = vmatpush1.msra.mxu0 0.0
  %294 = vmatprep.subr.mxu0 0.0
  %295 = vmatpush1.msra.mxu0 0.0
  %296 = vmatprep.subr.mxu0 0.0
  %297 = vmatpush1.msra.mxu0 0.0
  %298 = vmatprep.subr.mxu0 0.0
  %299 = vmatpush1.msra.mxu0 0.0
  %300 = vmatprep.subr.mxu0 0.0
  %301 = vmatpush1.msra.mxu0 0.0
  %302 = vmatprep.subr.mxu0 0.0
  %303 = vmatpush1.msra.mxu0 0.0
  %304 = vmatprep.subr.mxu0 0.0
  %305 = vmatpush1.msra.mxu0 0.0
  %306 = vmatprep.subr.mxu0 0.0
  %307 = vmatpush1.msra.mxu0 0.0
  %308 = vmatprep.mubr.f32.mxu0 0.0
  %309 = vmatmul.mubr.f32.gmra.mrb[0].mxu0 %v242
  %v310 = vpop.f32.mrb[0].mxu0
  %v311 = vadd.f32 0.0, %v310
  %v312 = vpop.f32.mrb[0].mxu0
  %v313 = vadd.f32 0.0, %v312
  %314 = vdwg.mxu0
  %v315 = vadd.f32 %v237, %v311
  %v316 = vadd.f32 %v238, %v313
  %v317 = vmul.f32 %v315, 0.5
  %v318 = vtanh.pop %v317
  %v319 = vmul.f32 %v318, 0.5
  %v320 = vadd.f32 %v319, 0.5
  %v321 = vtanh.pop %v316
  %v322 = vmul.f32 %v316, 0.5
  %v323 = vtanh.pop %v322
  %v324 = vmul.f32 %v323, 0.5
  %v325 = vadd.f32 %v324, 0.5
  %v326 = vmul.f32 %v320, %v201
  %v327 = vmul.f32 %v320, %v321
  %329 = vrot.lane.b32.xlu0 %v327, 64
  %v330 = vpop.permute.xlu0 %329
  %v332 = vadd.f32 %v326, %v330
  %v333 = vtanh.pop %v332
  %v334 = vmul.f32 %v325, %v333
  %v335 = vmul.f32 %v334, %v210
  %337 = vrot.lane.b32.xlu0 %v335, 64
  %v338 = vpop.permute.xlu0 %337
  %v340 = vsel %vm105, %v338, 0.0
  %341 = vadd.xlane.f32.xlu0 %v340
  %v342 = vpop.xlane.xlu0 %341
  %s343 = scalar_lea.vmem %s0, 16
  %v344 = vld [vmem:[%s343] sm:$0xff]
  %346 = vset.pattern.permute.xlu0 0
  %347 = vperm.xlu0 %346, %v344
  %v348 = vpop.permute.xlu0 %347
  %v350 = vmul.f32 %v348, %v64
  %v351 = vmul.f32 %v348, %v68
  %352 = vset.pattern.permute.xlu0 1
  %353 = vperm.xlu0 %352, %v344
  %v354 = vpop.permute.xlu0 %353
  %v356 = vmul.f32 %v354, %v81
  %v357 = vmul.f32 %v354, %v85
  %v358 = vadd.f32 %v350, %v356
  %v359 = vadd.f32 %v351, %v357
  %v360 = vadd.f32 %v358, %v96
  %v361 = vadd.f32 %v359, %v100
  %363 = vrot.lane.b32.xlu0 %v334, 64
  %v364 = vpop.permute.xlu0 %363
  %v365 = vsel %vm105, %v364, 0
  %367 = vmatprep.subr.mxu0 %v32
  %368 = vmatpush1.msra.mxu0 %v31
  %369 = vmatprep.subr.mxu0 %v34
  %370 = vmatpush1.msra.mxu0 %v33
  %371 = vmatprep.subr.mxu0 %v36
  %372 = vmatpush1.msra.mxu0 %v35
  %373 = vmatprep.subr.mxu0 %v38
  %374 = vmatpush1.msra.mxu0 %v37
  %375 = vmatprep.subr.mxu0 %v40
  %376 = vmatpush1.msra.mxu0 %v39
  %377 = vmatprep.subr.mxu0 %v42
  %378 = vmatpush1.msra.mxu0 %v41
  %379 = vmatprep.subr.mxu0 %v44
  %380 = vmatpush1.msra.mxu0 %v43
  %381 = vmatprep.subr.mxu0 %v46
  %382 = vmatpush1.msra.mxu0 %v45
  %383 = vmatprep.subr.mxu0 0.0
  %384 = vmatpush1.msra.mxu0 0.0
  %385 = vmatprep.subr.mxu0 0.0
  %386 = vmatpush1.msra.mxu0 0.0
  %387 = vmatprep.subr.mxu0 0.0
  %388 = vmatpush1.msra.mxu0 0.0
  %389 = vmatprep.subr.mxu0 0.0
  %390 = vmatpush1.msra.mxu0 0.0
  %391 = vmatprep.subr.mxu0 0.0
  %392 = vmatpush1.msra.mxu0 0.0
  %393 = vmatprep.subr.mxu0 0.0
  %394 = vmatpush1.msra.mxu0 0.0
  %395 = vmatprep.subr.mxu0 0.0
  %396 = vmatpush1.msra.mxu0 0.0
  %397 = vmatprep.subr.mxu0 0.0
  %398 = vmatpush1.msra.mxu0 0.0
  %399 = vmatprep.subr.mxu0 0.0
  %400 = vmatpush1.msra.mxu0 0.0
  %401 = vmatprep.subr.mxu0 0.0
  %402 = vmatpush1.msra.mxu0 0.0
  %403 = vmatprep.subr.mxu0 0.0
  %404 = vmatpush1.msra.mxu0 0.0
  %405 = vmatprep.subr.mxu0 0.0
  %406 = vmatpush1.msra.mxu0 0.0
  %407 = vmatprep.subr.mxu0 0.0
  %408 = vmatpush1.msra.mxu0 0.0
  %409 = vmatprep.subr.mxu0 0.0
  %410 = vmatpush1.msra.mxu0 0.0
  %411 = vmatprep.subr.mxu0 0.0
  %412 = vmatpush1.msra.mxu0 0.0
  %413 = vmatprep.subr.mxu0 0.0
  %414 = vmatpush1.msra.mxu0 0.0
  %415 = vmatprep.subr.mxu0 0.0
  %416 = vmatpush1.msra.mxu0 0.0
  %417 = vmatprep.subr.mxu0 0.0
  %418 = vmatpush1.msra.mxu0 0.0
  %419 = vmatprep.subr.mxu0 0.0
  %420 = vmatpush1.msra.mxu0 0.0
  %421 = vmatprep.subr.mxu0 0.0
  %422 = vmatpush1.msra.mxu0 0.0
  %423 = vmatprep.subr.mxu0 0.0
  %424 = vmatpush1.msra.mxu0 0.0
  %425 = vmatprep.subr.mxu0 0.0
  %426 = vmatpush1.msra.mxu0 0.0
  %427 = vmatprep.subr.mxu0 0.0
  %428 = vmatpush1.msra.mxu0 0.0
  %429 = vmatprep.subr.mxu0 0.0
  %430 = vmatpush1.msra.mxu0 0.0
  %431 = vmatprep.mubr.f32.mxu0 0.0
  %432 = vmatmul.mubr.f32.gmra.mrb[0].mxu0 %v365
  %v433 = vpop.f32.mrb[0].mxu0
  %v434 = vadd.f32 0.0, %v433
  %v435 = vpop.f32.mrb[0].mxu0
  %v436 = vadd.f32 0.0, %v435
  %437 = vdwg.mxu0
  %v438 = vadd.f32 %v360, %v434
  %v439 = vadd.f32 %v361, %v436
  %v440 = vmul.f32 %v438, 0.5
  %v441 = vtanh.pop %v440
  %v442 = vmul.f32 %v441, 0.5
  %v443 = vadd.f32 %v442, 0.5
  %v444 = vtanh.pop %v439
  %v445 = vmul.f32 %v439, 0.5
  %v446 = vtanh.pop %v445
  %v447 = vmul.f32 %v446, 0.5
  %v448 = vadd.f32 %v447, 0.5
  %v449 = vmul.f32 %v443, %v332
  %v450 = vmul.f32 %v443, %v444
  %452 = vrot.lane.b32.xlu0 %v450, 64
  %v453 = vpop.permute.xlu0 %452
  %v455 = vadd.f32 %v449, %v453
  %v456 = vtanh.pop %v455
  %v457 = vmul.f32 %v448, %v456
  %v458 = vmul.f32 %v457, %v210
  %460 = vrot.lane.b32.xlu0 %v458, 64
  %v461 = vpop.permute.xlu0 %460
  %v463 = vsel %vm105, %v461, 0.0
  %464 = vadd.xlane.f32.xlu0 %v463
  %v465 = vpop.xlane.xlu0 %464
  %s466 = scalar_lea.vmem %s0, 24
  %v467 = vld [vmem:[%s466] sm:$0xff]
  %469 = vset.pattern.permute.xlu0 0
  %470 = vperm.xlu0 %469, %v467
  %v471 = vpop.permute.xlu0 %470
  %v473 = vmul.f32 %v471, %v64
  %v474 = vmul.f32 %v471, %v68
  %475 = vset.pattern.permute.xlu0 1
  %476 = vperm.xlu0 %475, %v467
  %v477 = vpop.permute.xlu0 %476
  %v479 = vmul.f32 %v477, %v81
  %v480 = vmul.f32 %v477, %v85
  %v481 = vadd.f32 %v473, %v479
  %v482 = vadd.f32 %v474, %v480
  %v483 = vadd.f32 %v481, %v96
  %v484 = vadd.f32 %v482, %v100
  %486 = vrot.lane.b32.xlu0 %v457, 64
  %v487 = vpop.permute.xlu0 %486
  %v488 = vsel %vm105, %v487, 0
  %490 = vmatprep.subr.mxu0 %v32
  %491 = vmatpush1.msra.mxu0 %v31
  %492 = vmatprep.subr.mxu0 %v34
  %493 = vmatpush1.msra.mxu0 %v33
  %494 = vmatprep.subr.mxu0 %v36
  %495 = vmatpush1.msra.mxu0 %v35
  %496 = vmatprep.subr.mxu0 %v38
  %497 = vmatpush1.msra.mxu0 %v37
  %498 = vmatprep.subr.mxu0 %v40
  %499 = vmatpush1.msra.mxu0 %v39
  %500 = vmatprep.subr.mxu0 %v42
  %501 = vmatpush1.msra.mxu0 %v41
  %502 = vmatprep.subr.mxu0 %v44
  %503 = vmatpush1.msra.mxu0 %v43
  %504 = vmatprep.subr.mxu0 %v46
  %505 = vmatpush1.msra.mxu0 %v45
  %506 = vmatprep.subr.mxu0 0.0
  %507 = vmatpush1.msra.mxu0 0.0
  %508 = vmatprep.subr.mxu0 0.0
  %509 = vmatpush1.msra.mxu0 0.0
  %510 = vmatprep.subr.mxu0 0.0
  %511 = vmatpush1.msra.mxu0 0.0
  %512 = vmatprep.subr.mxu0 0.0
  %513 = vmatpush1.msra.mxu0 0.0
  %514 = vmatprep.subr.mxu0 0.0
  %515 = vmatpush1.msra.mxu0 0.0
  %516 = vmatprep.subr.mxu0 0.0
  %517 = vmatpush1.msra.mxu0 0.0
  %518 = vmatprep.subr.mxu0 0.0
  %519 = vmatpush1.msra.mxu0 0.0
  %520 = vmatprep.subr.mxu0 0.0
  %521 = vmatpush1.msra.mxu0 0.0
  %522 = vmatprep.subr.mxu0 0.0
  %523 = vmatpush1.msra.mxu0 0.0
  %524 = vmatprep.subr.mxu0 0.0
  %525 = vmatpush1.msra.mxu0 0.0
  %526 = vmatprep.subr.mxu0 0.0
  %527 = vmatpush1.msra.mxu0 0.0
  %528 = vmatprep.subr.mxu0 0.0
  %529 = vmatpush1.msra.mxu0 0.0
  %530 = vmatprep.subr.mxu0 0.0
  %531 = vmatpush1.msra.mxu0 0.0
  %532 = vmatprep.subr.mxu0 0.0
  %533 = vmatpush1.msra.mxu0 0.0
  %534 = vmatprep.subr.mxu0 0.0
  %535 = vmatpush1.msra.mxu0 0.0
  %536 = vmatprep.subr.mxu0 0.0
  %537 = vmatpush1.msra.mxu0 0.0
  %538 = vmatprep.subr.mxu0 0.0
  %539 = vmatpush1.msra.mxu0 0.0
  %540 = vmatprep.subr.mxu0 0.0
  %541 = vmatpush1.msra.mxu0 0.0
  %542 = vmatprep.subr.mxu0 0.0
  %543 = vmatpush1.msra.mxu0 0.0
  %544 = vmatprep.subr.mxu0 0.0
  %545 = vmatpush1.msra.mxu0 0.0
  %546 = vmatprep.subr.mxu0 0.0
  %547 = vmatpush1.msra.mxu0 0.0
  %548 = vmatprep.subr.mxu0 0.0
  %549 = vmatpush1.msra.mxu0 0.0
  %550 = vmatprep.subr.mxu0 0.0
  %551 = vmatpush1.msra.mxu0 0.0
  %552 = vmatprep.subr.mxu0 0.0
  %553 = vmatpush1.msra.mxu0 0.0
  %554 = vmatprep.mubr.f32.mxu0 0.0
  %555 = vmatmul.mubr.f32.gmra.mrb[0].mxu0 %v488
  %v556 = vpop.f32.mrb[0].mxu0
  %v557 = vadd.f32 0.0, %v556
  %v558 = vpop.f32.mrb[0].mxu0
  %v559 = vadd.f32 0.0, %v558
  %560 = vdwg.mxu0
  %v561 = vadd.f32 %v483, %v557
  %v562 = vadd.f32 %v484, %v559
  %v563 = vmul.f32 %v561, 0.5
  %v564 = vtanh.pop %v563
  %v565 = vmul.f32 %v564, 0.5
  %v566 = vadd.f32 %v565, 0.5
  %v567 = vtanh.pop %v562
  %v568 = vmul.f32 %v562, 0.5
  %v569 = vtanh.pop %v568
  %v570 = vmul.f32 %v569, 0.5
  %v571 = vadd.f32 %v570, 0.5
  %v572 = vmul.f32 %v566, %v455
  %v573 = vmul.f32 %v566, %v567
  %575 = vrot.lane.b32.xlu0 %v573, 64
  %v576 = vpop.permute.xlu0 %575
  %v578 = vadd.f32 %v572, %v576
  %v579 = vtanh.pop %v578
  %v580 = vmul.f32 %v571, %v579
  %v581 = vmul.f32 %v580, %v210
  %583 = vrot.lane.b32.xlu0 %v581, 64
  %v584 = vpop.permute.xlu0 %583
  %v586 = vsel %vm105, %v584, 0.0
  %587 = vadd.xlane.f32.xlu0 %v586
  %v588 = vpop.xlane.xlu0 %587
  %s589 = scalar_lea.vmem %s0, 32
  %v590 = vld [vmem:[%s589] sm:$0xff]
  %592 = vset.pattern.permute.xlu0 0
  %593 = vperm.xlu0 %592, %v590
  %v594 = vpop.permute.xlu0 %593
  %v596 = vmul.f32 %v594, %v64
  %v597 = vmul.f32 %v594, %v68
  %598 = vset.pattern.permute.xlu0 1
  %599 = vperm.xlu0 %598, %v590
  %v600 = vpop.permute.xlu0 %599
  %v602 = vmul.f32 %v600, %v81
  %v603 = vmul.f32 %v600, %v85
  %v604 = vadd.f32 %v596, %v602
  %v605 = vadd.f32 %v597, %v603
  %v606 = vadd.f32 %v604, %v96
  %v607 = vadd.f32 %v605, %v100
  %609 = vrot.lane.b32.xlu0 %v580, 64
  %v610 = vpop.permute.xlu0 %609
  %v611 = vsel %vm105, %v610, 0
  %613 = vmatprep.subr.mxu0 %v32
  %614 = vmatpush1.msra.mxu0 %v31
  %615 = vmatprep.subr.mxu0 %v34
  %616 = vmatpush1.msra.mxu0 %v33
  %617 = vmatprep.subr.mxu0 %v36
  %618 = vmatpush1.msra.mxu0 %v35
  %619 = vmatprep.subr.mxu0 %v38
  %620 = vmatpush1.msra.mxu0 %v37
  %621 = vmatprep.subr.mxu0 %v40
  %622 = vmatpush1.msra.mxu0 %v39
  %623 = vmatprep.subr.mxu0 %v42
  %624 = vmatpush1.msra.mxu0 %v41
  %625 = vmatprep.subr.mxu0 %v44
  %626 = vmatpush1.msra.mxu0 %v43
  %627 = vmatprep.subr.mxu0 %v46
  %628 = vmatpush1.msra.mxu0 %v45
  %629 = vmatprep.subr.mxu0 0.0
  %630 = vmatpush1.msra.mxu0 0.0
  %631 = vmatprep.subr.mxu0 0.0
  %632 = vmatpush1.msra.mxu0 0.0
  %633 = vmatprep.subr.mxu0 0.0
  %634 = vmatpush1.msra.mxu0 0.0
  %635 = vmatprep.subr.mxu0 0.0
  %636 = vmatpush1.msra.mxu0 0.0
  %637 = vmatprep.subr.mxu0 0.0
  %638 = vmatpush1.msra.mxu0 0.0
  %639 = vmatprep.subr.mxu0 0.0
  %640 = vmatpush1.msra.mxu0 0.0
  %641 = vmatprep.subr.mxu0 0.0
  %642 = vmatpush1.msra.mxu0 0.0
  %643 = vmatprep.subr.mxu0 0.0
  %644 = vmatpush1.msra.mxu0 0.0
  %645 = vmatprep.subr.mxu0 0.0
  %646 = vmatpush1.msra.mxu0 0.0
  %647 = vmatprep.subr.mxu0 0.0
  %648 = vmatpush1.msra.mxu0 0.0
  %649 = vmatprep.subr.mxu0 0.0
  %650 = vmatpush1.msra.mxu0 0.0
  %651 = vmatprep.subr.mxu0 0.0
  %652 = vmatpush1.msra.mxu0 0.0
  %653 = vmatprep.subr.mxu0 0.0
  %654 = vmatpush1.msra.mxu0 0.0
  %655 = vmatprep.subr.mxu0 0.0
  %656 = vmatpush1.msra.mxu0 0.0
  %657 = vmatprep.subr.mxu0 0.0
  %658 = vmatpush1.msra.mxu0 0.0
  %659 = vmatprep.subr.mxu0 0.0
  %660 = vmatpush1.msra.mxu0 0.0
  %661 = vmatprep.subr.mxu0 0.0
  %662 = vmatpush1.msra.mxu0 0.0
  %663 = vmatprep.subr.mxu0 0.0
  %664 = vmatpush1.msra.mxu0 0.0
  %665 = vmatprep.subr.mxu0 0.0
  %666 = vmatpush1.msra.mxu0 0.0
  %667 = vmatprep.subr.mxu0 0.0
  %668 = vmatpush1.msra.mxu0 0.0
  %669 = vmatprep.subr.mxu0 0.0
  %670 = vmatpush1.msra.mxu0 0.0
  %671 = vmatprep.subr.mxu0 0.0
  %672 = vmatpush1.msra.mxu0 0.0
  %673 = vmatprep.subr.mxu0 0.0
  %674 = vmatpush1.msra.mxu0 0.0
  %675 = vmatprep.subr.mxu0 0.0
  %676 = vmatpush1.msra.mxu0 0.0
  %677 = vmatprep.mubr.f32.mxu0 0.0
  %678 = vmatmul.mubr.f32.gmra.mrb[0].mxu0 %v611
  %v679 = vpop.f32.mrb[0].mxu0
  %v680 = vadd.f32 0.0, %v679
  %v681 = vpop.f32.mrb[0].mxu0
  %v682 = vadd.f32 0.0, %v681
  %683 = vdwg.mxu0
  %v684 = vadd.f32 %v606, %v680
  %v685 = vadd.f32 %v607, %v682
  %v686 = vmul.f32 %v684, 0.5
  %v687 = vtanh.pop %v686
  %v688 = vmul.f32 %v687, 0.5
  %v689 = vadd.f32 %v688, 0.5
  %v690 = vtanh.pop %v685
  %v691 = vmul.f32 %v685, 0.5
  %v692 = vtanh.pop %v691
  %v693 = vmul.f32 %v692, 0.5
  %v694 = vadd.f32 %v693, 0.5
  %v695 = vmul.f32 %v689, %v578
  %v696 = vmul.f32 %v689, %v690
  %698 = vrot.lane.b32.xlu0 %v696, 64
  %v699 = vpop.permute.xlu0 %698
  %v701 = vadd.f32 %v695, %v699
  %v702 = vtanh.pop %v701
  %v703 = vmul.f32 %v694, %v702
  %v704 = vmul.f32 %v703, %v210
  %706 = vrot.lane.b32.xlu0 %v704, 64
  %v707 = vpop.permute.xlu0 %706
  %v709 = vsel %vm105, %v707, 0.0
  %710 = vadd.xlane.f32.xlu0 %v709
  %v711 = vpop.xlane.xlu0 %710
  %s712 = scalar_lea.vmem %s0, 40
  %v713 = vld [vmem:[%s712] sm:$0xff]
  %715 = vset.pattern.permute.xlu0 0
  %716 = vperm.xlu0 %715, %v713
  %v717 = vpop.permute.xlu0 %716
  %v719 = vmul.f32 %v717, %v64
  %v720 = vmul.f32 %v717, %v68
  %721 = vset.pattern.permute.xlu0 1
  %722 = vperm.xlu0 %721, %v713
  %v723 = vpop.permute.xlu0 %722
  %v725 = vmul.f32 %v723, %v81
  %v726 = vmul.f32 %v723, %v85
  %v727 = vadd.f32 %v719, %v725
  %v728 = vadd.f32 %v720, %v726
  %v729 = vadd.f32 %v727, %v96
  %v730 = vadd.f32 %v728, %v100
  %732 = vrot.lane.b32.xlu0 %v703, 64
  %v733 = vpop.permute.xlu0 %732
  %v734 = vsel %vm105, %v733, 0
  %736 = vmatprep.subr.mxu0 %v32
  %737 = vmatpush1.msra.mxu0 %v31
  %738 = vmatprep.subr.mxu0 %v34
  %739 = vmatpush1.msra.mxu0 %v33
  %740 = vmatprep.subr.mxu0 %v36
  %741 = vmatpush1.msra.mxu0 %v35
  %742 = vmatprep.subr.mxu0 %v38
  %743 = vmatpush1.msra.mxu0 %v37
  %744 = vmatprep.subr.mxu0 %v40
  %745 = vmatpush1.msra.mxu0 %v39
  %746 = vmatprep.subr.mxu0 %v42
  %747 = vmatpush1.msra.mxu0 %v41
  %748 = vmatprep.subr.mxu0 %v44
  %749 = vmatpush1.msra.mxu0 %v43
  %750 = vmatprep.subr.mxu0 %v46
  %751 = vmatpush1.msra.mxu0 %v45
  %752 = vmatprep.subr.mxu0 0.0
  %753 = vmatpush1.msra.mxu0 0.0
  %754 = vmatprep.subr.mxu0 0.0
  %755 = vmatpush1.msra.mxu0 0.0
  %756 = vmatprep.subr.mxu0 0.0
  %757 = vmatpush1.msra.mxu0 0.0
  %758 = vmatprep.subr.mxu0 0.0
  %759 = vmatpush1.msra.mxu0 0.0
  %760 = vmatprep.subr.mxu0 0.0
  %761 = vmatpush1.msra.mxu0 0.0
  %762 = vmatprep.subr.mxu0 0.0
  %763 = vmatpush1.msra.mxu0 0.0
  %764 = vmatprep.subr.mxu0 0.0
  %765 = vmatpush1.msra.mxu0 0.0
  %766 = vmatprep.subr.mxu0 0.0
  %767 = vmatpush1.msra.mxu0 0.0
  %768 = vmatprep.subr.mxu0 0.0
  %769 = vmatpush1.msra.mxu0 0.0
  %770 = vmatprep.subr.mxu0 0.0
  %771 = vmatpush1.msra.mxu0 0.0
  %772 = vmatprep.subr.mxu0 0.0
  %773 = vmatpush1.msra.mxu0 0.0
  %774 = vmatprep.subr.mxu0 0.0
  %775 = vmatpush1.msra.mxu0 0.0
  %776 = vmatprep.subr.mxu0 0.0
  %777 = vmatpush1.msra.mxu0 0.0
  %778 = vmatprep.subr.mxu0 0.0
  %779 = vmatpush1.msra.mxu0 0.0
  %780 = vmatprep.subr.mxu0 0.0
  %781 = vmatpush1.msra.mxu0 0.0
  %782 = vmatprep.subr.mxu0 0.0
  %783 = vmatpush1.msra.mxu0 0.0
  %784 = vmatprep.subr.mxu0 0.0
  %785 = vmatpush1.msra.mxu0 0.0
  %786 = vmatprep.subr.mxu0 0.0
  %787 = vmatpush1.msra.mxu0 0.0
  %788 = vmatprep.subr.mxu0 0.0
  %789 = vmatpush1.msra.mxu0 0.0
  %790 = vmatprep.subr.mxu0 0.0
  %791 = vmatpush1.msra.mxu0 0.0
  %792 = vmatprep.subr.mxu0 0.0
  %793 = vmatpush1.msra.mxu0 0.0
  %794 = vmatprep.subr.mxu0 0.0
  %795 = vmatpush1.msra.mxu0 0.0
  %796 = vmatprep.subr.mxu0 0.0
  %797 = vmatpush1.msra.mxu0 0.0
  %798 = vmatprep.subr.mxu0 0.0
  %799 = vmatpush1.msra.mxu0 0.0
  %800 = vmatprep.mubr.f32.mxu0 0.0
  %801 = vmatmul.mubr.f32.gmra.mrb[0].mxu0 %v734
  %v802 = vpop.f32.mrb[0].mxu0
  %v803 = vadd.f32 0.0, %v802
  %v804 = vpop.f32.mrb[0].mxu0
  %v805 = vadd.f32 0.0, %v804
  %806 = vdwg.mxu0
  %v807 = vadd.f32 %v729, %v803
  %v808 = vadd.f32 %v730, %v805
  %v809 = vmul.f32 %v807, 0.5
  %v810 = vtanh.pop %v809
  %v811 = vmul.f32 %v810, 0.5
  %v812 = vadd.f32 %v811, 0.5
  %v813 = vtanh.pop %v808
  %v814 = vmul.f32 %v808, 0.5
  %v815 = vtanh.pop %v814
  %v816 = vmul.f32 %v815, 0.5
  %v817 = vadd.f32 %v816, 0.5
  %v818 = vmul.f32 %v812, %v701
  %v819 = vmul.f32 %v812, %v813
  %821 = vrot.lane.b32.xlu0 %v819, 64
  %v822 = vpop.permute.xlu0 %821
  %v824 = vadd.f32 %v818, %v822
  %v825 = vtanh.pop %v824
  %v826 = vmul.f32 %v817, %v825
  %v827 = vmul.f32 %v826, %v210
  %829 = vrot.lane.b32.xlu0 %v827, 64
  %v830 = vpop.permute.xlu0 %829
  %v832 = vsel %vm105, %v830, 0.0
  %833 = vadd.xlane.f32.xlu0 %v832
  %v834 = vpop.xlane.xlu0 %833
  %s835 = scalar_lea.vmem %s0, 48
  %v836 = vld [vmem:[%s835] sm:$0xff]
  %838 = vset.pattern.permute.xlu0 0
  %839 = vperm.xlu0 %838, %v836
  %v840 = vpop.permute.xlu0 %839
  %v842 = vmul.f32 %v840, %v64
  %v843 = vmul.f32 %v840, %v68
  %844 = vset.pattern.permute.xlu0 1
  %845 = vperm.xlu0 %844, %v836
  %v846 = vpop.permute.xlu0 %845
  %v848 = vmul.f32 %v846, %v81
  %v849 = vmul.f32 %v846, %v85
  %v850 = vadd.f32 %v842, %v848
  %v851 = vadd.f32 %v843, %v849
  %v852 = vadd.f32 %v850, %v96
  %v853 = vadd.f32 %v851, %v100
  %855 = vrot.lane.b32.xlu0 %v826, 64
  %v856 = vpop.permute.xlu0 %855
  %v857 = vsel %vm105, %v856, 0
  %859 = vmatprep.subr.mxu0 %v32
  %860 = vmatpush1.msra.mxu0 %v31
  %861 = vmatprep.subr.mxu0 %v34
  %862 = vmatpush1.msra.mxu0 %v33
  %863 = vmatprep.subr.mxu0 %v36
  %864 = vmatpush1.msra.mxu0 %v35
  %865 = vmatprep.subr.mxu0 %v38
  %866 = vmatpush1.msra.mxu0 %v37
  %867 = vmatprep.subr.mxu0 %v40
  %868 = vmatpush1.msra.mxu0 %v39
  %869 = vmatprep.subr.mxu0 %v42
  %870 = vmatpush1.msra.mxu0 %v41
  %871 = vmatprep.subr.mxu0 %v44
  %872 = vmatpush1.msra.mxu0 %v43
  %873 = vmatprep.subr.mxu0 %v46
  %874 = vmatpush1.msra.mxu0 %v45
  %875 = vmatprep.subr.mxu0 0.0
  %876 = vmatpush1.msra.mxu0 0.0
  %877 = vmatprep.subr.mxu0 0.0
  %878 = vmatpush1.msra.mxu0 0.0
  %879 = vmatprep.subr.mxu0 0.0
  %880 = vmatpush1.msra.mxu0 0.0
  %881 = vmatprep.subr.mxu0 0.0
  %882 = vmatpush1.msra.mxu0 0.0
  %883 = vmatprep.subr.mxu0 0.0
  %884 = vmatpush1.msra.mxu0 0.0
  %885 = vmatprep.subr.mxu0 0.0
  %886 = vmatpush1.msra.mxu0 0.0
  %887 = vmatprep.subr.mxu0 0.0
  %888 = vmatpush1.msra.mxu0 0.0
  %889 = vmatprep.subr.mxu0 0.0
  %890 = vmatpush1.msra.mxu0 0.0
  %891 = vmatprep.subr.mxu0 0.0
  %892 = vmatpush1.msra.mxu0 0.0
  %893 = vmatprep.subr.mxu0 0.0
  %894 = vmatpush1.msra.mxu0 0.0
  %895 = vmatprep.subr.mxu0 0.0
  %896 = vmatpush1.msra.mxu0 0.0
  %897 = vmatprep.subr.mxu0 0.0
  %898 = vmatpush1.msra.mxu0 0.0
  %899 = vmatprep.subr.mxu0 0.0
  %900 = vmatpush1.msra.mxu0 0.0
  %901 = vmatprep.subr.mxu0 0.0
  %902 = vmatpush1.msra.mxu0 0.0
  %903 = vmatprep.subr.mxu0 0.0
  %904 = vmatpush1.msra.mxu0 0.0
  %905 = vmatprep.subr.mxu0 0.0
  %906 = vmatpush1.msra.mxu0 0.0
  %907 = vmatprep.subr.mxu0 0.0
  %908 = vmatpush1.msra.mxu0 0.0
  %909 = vmatprep.subr.mxu0 0.0
  %910 = vmatpush1.msra.mxu0 0.0
  %911 = vmatprep.subr.mxu0 0.0
  %912 = vmatpush1.msra.mxu0 0.0
  %913 = vmatprep.subr.mxu0 0.0
  %914 = vmatpush1.msra.mxu0 0.0
  %915 = vmatprep.subr.mxu0 0.0
  %916 = vmatpush1.msra.mxu0 0.0
  %917 = vmatprep.subr.mxu0 0.0
  %918 = vmatpush1.msra.mxu0 0.0
  %919 = vmatprep.subr.mxu0 0.0
  %920 = vmatpush1.msra.mxu0 0.0
  %921 = vmatprep.subr.mxu0 0.0
  %922 = vmatpush1.msra.mxu0 0.0
  %923 = vmatprep.mubr.f32.mxu0 0.0
  %924 = vmatmul.mubr.f32.gmra.mrb[0].mxu0 %v857
  %v925 = vpop.f32.mrb[0].mxu0
  %v926 = vadd.f32 0.0, %v925
  %v927 = vpop.f32.mrb[0].mxu0
  %v928 = vadd.f32 0.0, %v927
  %929 = vdwg.mxu0
  %v930 = vadd.f32 %v852, %v926
  %v931 = vadd.f32 %v853, %v928
  %v932 = vmul.f32 %v930, 0.5
  %v933 = vtanh.pop %v932
  %v934 = vmul.f32 %v933, 0.5
  %v935 = vadd.f32 %v934, 0.5
  %v936 = vtanh.pop %v931
  %v937 = vmul.f32 %v931, 0.5
  %v938 = vtanh.pop %v937
  %v939 = vmul.f32 %v938, 0.5
  %v940 = vadd.f32 %v939, 0.5
  %v941 = vmul.f32 %v935, %v824
  %v942 = vmul.f32 %v935, %v936
  %944 = vrot.lane.b32.xlu0 %v942, 64
  %v945 = vpop.permute.xlu0 %944
  %v947 = vadd.f32 %v941, %v945
  %v948 = vtanh.pop %v947
  %v949 = vmul.f32 %v940, %v948
  %v950 = vmul.f32 %v949, %v210
  %952 = vrot.lane.b32.xlu0 %v950, 64
  %v953 = vpop.permute.xlu0 %952
  %v955 = vsel %vm105, %v953, 0.0
  %956 = vadd.xlane.f32.xlu0 %v955
  %v957 = vpop.xlane.xlu0 %956
  %s958 = scalar_lea.vmem %s0, 56
  %v959 = vld [vmem:[%s958] sm:$0xff]
  %961 = vset.pattern.permute.xlu0 0
  %962 = vperm.xlu0 %961, %v959
  %v963 = vpop.permute.xlu0 %962
  %v965 = vmul.f32 %v963, %v64
  %v966 = vmul.f32 %v963, %v68
  %967 = vset.pattern.permute.xlu0 1
  %968 = vperm.xlu0 %967, %v959
  %v969 = vpop.permute.xlu0 %968
  %v971 = vmul.f32 %v969, %v81
  %v972 = vmul.f32 %v969, %v85
  %v973 = vadd.f32 %v965, %v971
  %v974 = vadd.f32 %v966, %v972
  %v975 = vadd.f32 %v973, %v96
  %v976 = vadd.f32 %v974, %v100
  %978 = vrot.lane.b32.xlu0 %v949, 64
  %v979 = vpop.permute.xlu0 %978
  %v980 = vsel %vm105, %v979, 0
  %982 = vmatprep.subr.mxu0 %v32
  %983 = vmatpush1.msra.mxu0 %v31
  %984 = vmatprep.subr.mxu0 %v34
  %985 = vmatpush1.msra.mxu0 %v33
  %986 = vmatprep.subr.mxu0 %v36
  %987 = vmatpush1.msra.mxu0 %v35
  %988 = vmatprep.subr.mxu0 %v38
  %989 = vmatpush1.msra.mxu0 %v37
  %990 = vmatprep.subr.mxu0 %v40
  %991 = vmatpush1.msra.mxu0 %v39
  %992 = vmatprep.subr.mxu0 %v42
  %993 = vmatpush1.msra.mxu0 %v41
  %994 = vmatprep.subr.mxu0 %v44
  %995 = vmatpush1.msra.mxu0 %v43
  %996 = vmatprep.subr.mxu0 %v46
  %997 = vmatpush1.msra.mxu0 %v45
  %998 = vmatprep.subr.mxu0 0.0
  %999 = vmatpush1.msra.mxu0 0.0
  %1000 = vmatprep.subr.mxu0 0.0
  %1001 = vmatpush1.msra.mxu0 0.0
  %1002 = vmatprep.subr.mxu0 0.0
  %1003 = vmatpush1.msra.mxu0 0.0
  %1004 = vmatprep.subr.mxu0 0.0
  %1005 = vmatpush1.msra.mxu0 0.0
  %1006 = vmatprep.subr.mxu0 0.0
  %1007 = vmatpush1.msra.mxu0 0.0
  %1008 = vmatprep.subr.mxu0 0.0
  %1009 = vmatpush1.msra.mxu0 0.0
  %1010 = vmatprep.subr.mxu0 0.0
  %1011 = vmatpush1.msra.mxu0 0.0
  %1012 = vmatprep.subr.mxu0 0.0
  %1013 = vmatpush1.msra.mxu0 0.0
  %1014 = vmatprep.subr.mxu0 0.0
  %1015 = vmatpush1.msra.mxu0 0.0
  %1016 = vmatprep.subr.mxu0 0.0
  %1017 = vmatpush1.msra.mxu0 0.0
  %1018 = vmatprep.subr.mxu0 0.0
  %1019 = vmatpush1.msra.mxu0 0.0
  %1020 = vmatprep.subr.mxu0 0.0
  %1021 = vmatpush1.msra.mxu0 0.0
  %1022 = vmatprep.subr.mxu0 0.0
  %1023 = vmatpush1.msra.mxu0 0.0
  %1024 = vmatprep.subr.mxu0 0.0
  %1025 = vmatpush1.msra.mxu0 0.0
  %1026 = vmatprep.subr.mxu0 0.0
  %1027 = vmatpush1.msra.mxu0 0.0
  %1028 = vmatprep.subr.mxu0 0.0
  %1029 = vmatpush1.msra.mxu0 0.0
  %1030 = vmatprep.subr.mxu0 0.0
  %1031 = vmatpush1.msra.mxu0 0.0
  %1032 = vmatprep.subr.mxu0 0.0
  %1033 = vmatpush1.msra.mxu0 0.0
  %1034 = vmatprep.subr.mxu0 0.0
  %1035 = vmatpush1.msra.mxu0 0.0
  %1036 = vmatprep.subr.mxu0 0.0
  %1037 = vmatpush1.msra.mxu0 0.0
  %1038 = vmatprep.subr.mxu0 0.0
  %1039 = vmatpush1.msra.mxu0 0.0
  %1040 = vmatprep.subr.mxu0 0.0
  %1041 = vmatpush1.msra.mxu0 0.0
  %1042 = vmatprep.subr.mxu0 0.0
  %1043 = vmatpush1.msra.mxu0 0.0
  %1044 = vmatprep.subr.mxu0 0.0
  %1045 = vmatpush1.msra.mxu0 0.0
  %1046 = vmatprep.mubr.f32.mxu0 0.0
  %1047 = vmatmul.mubr.f32.gmra.mrb[0].mxu0 %v980
  %v1048 = vpop.f32.mrb[0].mxu0
  %v1049 = vadd.f32 0.0, %v1048
  %v1050 = vpop.f32.mrb[0].mxu0
  %v1051 = vadd.f32 0.0, %v1050
  %1052 = vdwg.mxu0
  %v1053 = vadd.f32 %v975, %v1049
  %v1054 = vadd.f32 %v976, %v1051
  %v1055 = vmul.f32 %v1053, 0.5
  %v1056 = vtanh.pop %v1055
  %v1057 = vmul.f32 %v1056, 0.5
  %v1058 = vadd.f32 %v1057, 0.5
  %v1059 = vtanh.pop %v1054
  %v1060 = vmul.f32 %v1054, 0.5
  %v1061 = vtanh.pop %v1060
  %v1062 = vmul.f32 %v1061, 0.5
  %v1063 = vadd.f32 %v1062, 0.5
  %v1064 = vmul.f32 %v1058, %v947
  %v1065 = vmul.f32 %v1058, %v1059
  %1067 = vrot.lane.b32.xlu0 %v1065, 64
  %v1068 = vpop.permute.xlu0 %1067
  %v1070 = vadd.f32 %v1064, %v1068
  %v1071 = vtanh.pop %v1070
  %v1072 = vmul.f32 %v1063, %v1071
  %v1073 = vmul.f32 %v1072, %v210
  %1075 = vrot.lane.b32.xlu0 %v1073, 64
  %v1076 = vpop.permute.xlu0 %1075
  %v1078 = vsel %vm105, %v1076, 0.0
  %1079 = vadd.xlane.f32.xlu0 %v1078
  %v1080 = vpop.xlane.xlu0 %1079
  %vm1081 = vcmask 7168
  %v1082 = vsel %vm1081, %v219, %v342
  %vm1083 = vcmask 15360
  %v1084 = vsel %vm1083, %v1082, %v465
  %vm1085 = vcmask 23552
  %v1086 = vsel %vm1085, %v1084, %v588
  %vm1087 = vcmask 31744
  %v1088 = vsel %vm1087, %v1086, %v711
  %vm1089 = vcmask 39936
  %v1090 = vsel %vm1089, %v1088, %v834
  %vm1091 = vcmask 48128
  %v1092 = vsel %vm1091, %v1090, %v957
  %vm1093 = vcmask 56320
  %v1094 = vsel %vm1093, %v1092, %v1080
  %v1095 = vld [vmem:[#allocation2] sm:$0x1]
  %v1097 = vlaneseq
  %v1098 = vshrl.u32 %v1097, 7
  %v1099 = vsub.s32 0, %v1098
  %v1100 = vrot.slane %v1095, %v1099
  %1101 = vset.pattern.permute.xlu0 0
  %1102 = vperm.xlu0 %1101, %v1100
  %v1103 = vpop.permute.xlu0 %1102
  %v1105 = vadd.f32 %v1094, %v1103
  %vm1106 = vcmask 64512
  %1107 = vst.msk [vmem:[%s8] sm:$0xff] %vm1106, %v1105
  // Predicated region
  $region34: #{lstm_forward.1} parent=0 // pred_check
    _
  $region35: #{lstm_forward.1} parent=0 // pred_check_branch
    %1109 = sbr.rel (0) target = $region37
  $region36: #{lstm_forward.1} parent=0 // pred_region
    _
  $region37: #{lstm_forward.1} parent=0 // pred_fallthru
    _
  // Predicated region
  $region38: #{lstm_forward.1} parent=0 // pred_check
    _
  $region39: #{lstm_forward.1} parent=0 // pred_check_branch
    %1111 = sbr.rel (0) target = $region41
  $region40: #{lstm_forward.1} parent=0 // pred_region
    _
  $region41: #{lstm_forward.1} parent=0 // pred_fallthru
    _

</llo_original>
